<compile_context>
chip_gen: v7x
topology: tpu7x:2x2x1
jax: 0.10.0
libtpu: 0.0.40
codegen_flags: <defaults>
</compile_context>

<pallas_src>
import jax
import jax.numpy as jnp
from jax.experimental import pallas as pl
from jax.experimental.pallas import tpu as pltpu

# Small, TPU-friendly synthetic hyperparameters (stand-ins for cargan constants).
AR_INPUT_SIZE = 256
AR_HIDDEN_SIZE = 256
AR_OUTPUT_SIZE = 128

LEAK = 0.1  # matches torch.nn.LeakyReLU(0.1) in the module


def _leaky_relu(z):
    # max(z, 0.1*z) == LeakyReLU(0.1)(z) for 0 < LEAK < 1  (mul+max, no select)
    return jnp.maximum(z, LEAK * z)


def _mlp_kernel(x_ref, w1_ref, w2_ref, w3_ref, w4_ref, w5_ref, b_ref, o_ref):
    """Whole 5-layer MLP for one (ROW_TILE, IN) row tile, entirely in VMEM.

    The tile is split into two independent halves whose layer chains are
    interleaved so MXU pushes of one half overlap the VPU epilogue
    (bias + LeakyReLU + bf16 cast) of the other half.
    """
    half = x_ref.shape[0] // 2
    w_refs = (w1_ref, w2_ref, w3_ref, w4_ref)

    ha = x_ref[:half, :]        # already bf16 (streamed bf16 from HBM)
    hb = x_ref[half:, :]

    for li in range(4):
        w = w_refs[li][...]
        b = b_ref[li:li + 1, :]
        za = jnp.dot(ha, w, preferred_element_type=jnp.float32)
        zb = jnp.dot(hb, w, preferred_element_type=jnp.float32)
        ha = _leaky_relu(za + b).astype(jnp.bfloat16)
        hb = _leaky_relu(zb + b).astype(jnp.bfloat16)

    w5 = w5_ref[...]
    b5 = b_ref[4:5, :AR_OUTPUT_SIZE]
    ya = jnp.dot(ha, w5, preferred_element_type=jnp.float32) + b5
    yb = jnp.dot(hb, w5, preferred_element_type=jnp.float32) + b5
    o_ref[:half, :] = ya.astype(o_ref.dtype)
    o_ref[half:, :] = yb.astype(o_ref.dtype)


def pack_params(params):
    """[(w, b), ...] with w stored (in, out) -> (bf16 weights, packed (5, H) f32 bias).

    NOTE: PyTorch nn.Linear stores weight as (out, in); transpose real
    checkpoints before passing them here.
    """
    ws = tuple(w.astype(jnp.bfloat16) for (w, _) in params)
    rows = []
    for (_, b) in params:
        b = b.reshape(1, -1).astype(jnp.float32)
        if b.shape[1] < AR_HIDDEN_SIZE:
            b = jnp.pad(b, ((0, 0), (0, AR_HIDDEN_SIZE - b.shape[1])))
        rows.append(b)
    return ws, jnp.concatenate(rows, axis=0)


def _choose_row_tile(m):
    """Largest tile in {512, 256, 128} that keeps >= 2 grid steps (feeds both
    v7x TensorCores); falls back to 128 for small / single-step calls."""
    for t in (512, 256, 128):
        if m >= 2 * t:
            return t
    return 128


@jax.jit
def autoregressive_forward(x, params):
    """x: (..., 1, AR_INPUT_SIZE) -> (..., AR_OUTPUT_SIZE) f32.

    Matches torch's `self.model(x.squeeze(1))`.  All leading dims (e.g.
    stacked AR steps x batch) are flattened into the M axis so the MXU sees
    large row tiles while the weights stay resident across the grid.
    """
    assert x.shape[-2] == 1 and x.shape[-1] == AR_INPUT_SIZE
    lead = x.shape[:-2]
    # Stream the input as bf16: halves HBM bytes; numerics identical to the
    # old in-kernel bf16 cast before the first MXU op.
    x2d = x.reshape((-1, AR_INPUT_SIZE)).astype(jnp.bfloat16)
    m = x2d.shape[0]

    row_tile = _choose_row_tile(m)
    m_pad = pl.cdiv(m, row_tile) * row_tile
    if m_pad != m:
        x2d = jnp.pad(x2d, ((0, m_pad - m), (0, 0)))
    n_tiles = m_pad // row_tile

    ws, b_packed = pack_params(params)

    const_map = lambda i: (0, 0)           # resident across the grid
    row_map = lambda i: (i, 0)             # streamed per row tile
    w_specs = [pl.BlockSpec(w.shape, const_map) for w in ws]
    b_spec = pl.BlockSpec(b_packed.shape, const_map)

    flops = 2 * m_pad * (AR_INPUT_SIZE * AR_HIDDEN_SIZE
                         + 3 * AR_HIDDEN_SIZE * AR_HIDDEN_SIZE
                         + AR_HIDDEN_SIZE * AR_OUTPUT_SIZE)
    bytes_accessed = (sum(int(w.size) * 2 for w in ws)      # bf16 weights
                      + int(b_packed.size) * 4               # f32 biases
                      + int(x2d.size) * 2                    # bf16 input
                      + m_pad * AR_OUTPUT_SIZE * 4)          # f32 output

    out = pl.pallas_call(
        _mlp_kernel,
        out_shape=jax.ShapeDtypeStruct((m_pad, AR_OUTPUT_SIZE), jnp.float32),
        grid_spec=pltpu.PrefetchScalarGridSpec(
            num_scalar_prefetch=0,
            grid=(n_tiles,),
            in_specs=[pl.BlockSpec((row_tile, AR_INPUT_SIZE), row_map)]
                     + w_specs + [b_spec],
            out_specs=pl.BlockSpec((row_tile, AR_OUTPUT_SIZE), row_map),
        ),
        compiler_params=pltpu.CompilerParams(
            dimension_semantics=("parallel",)),
        cost_estimate=pl.CostEstimate(
            flops=flops, transcendentals=0, bytes_accessed=bytes_accessed),
    )(x2d, *ws, b_packed)

    return out[:m].reshape(lead + (AR_OUTPUT_SIZE,))


def init_params(key):
    """Deterministic PyTorch-Linear-style init: U(-1/sqrt(fan_in), 1/sqrt(fan_in))."""
    dims = [(AR_INPUT_SIZE, AR_HIDDEN_SIZE),
            (AR_HIDDEN_SIZE, AR_HIDDEN_SIZE),
            (AR_HIDDEN_SIZE, AR_HIDDEN_SIZE),
            (AR_HIDDEN_SIZE, AR_HIDDEN_SIZE),
            (AR_HIDDEN_SIZE, AR_OUTPUT_SIZE)]
    params = []
    for (fan_in, fan_out) in dims:
        key, kw, kb = jax.random.split(key, 3)
        bound = 1.0 / (fan_in ** 0.5)
        w = jax.random.uniform(kw, (fan_in, fan_out), jnp.float32, -bound, bound)
        b = jax.random.uniform(kb, (1, fan_out), jnp.float32, -bound, bound)
        params.append((w, b))
    return params


def reference_forward(x, params):
    """Pure-JAX f32 reference matching the PyTorch module."""
    h = jnp.squeeze(x, axis=-2)
    for i, (w, b) in enumerate(params):
        h = h @ w + b
        if i < len(params) - 1:
            h = jnp.where(h > 0, h, LEAK * h)
    return h


if __name__ == "__main__":
    key = jax.random.PRNGKey(0)
    key, kx = jax.random.split(key)
    params = init_params(key)

    # 1) Original single-step call: (B, 1, IN) -> padded to one 128-row tile.
    B = 8
    x_step = jax.random.normal(kx, (B, 1, AR_INPUT_SIZE), jnp.float32)
    out_step = jax.block_until_ready(autoregressive_forward(x_step, params))
    ref_step = reference_forward(x_step, params)
    assert out_step.shape == (B, AR_OUTPUT_SIZE)
    assert jnp.allclose(out_step, ref_step, atol=3e-2, rtol=3e-2)

    # 2) Stacked AR steps: (T, B, 1, IN) -> M = 256 rows, row_tile=128, 2 tiles.
    T = 32
    key, ks = jax.random.split(key)
    x_stack = jax.random.normal(ks, (T, B, 1, AR_INPUT_SIZE), jnp.float32)
    out_stack = jax.block_until_ready(autoregressive_forward(x_stack, params))
    ref_stack = reference_forward(x_stack, params)
    assert out_stack.shape == (T, B, AR_OUTPUT_SIZE)
    assert jnp.allclose(out_stack, ref_stack, atol=3e-2, rtol=3e-2)

    # 3) Larger stack: M = 512 rows -> row_tile=256, 2 tiles (exercises the
    #    dynamic tile choice + half-tile interleave at half=128).
    T2 = 64
    key, ks2 = jax.random.split(key)
    x_big = jax.random.normal(ks2, (T2, B, 1, AR_INPUT_SIZE), jnp.float32)
    out_big = jax.block_until_ready(autoregressive_forward(x_big, params))
    ref_big = reference_forward(x_big, params)
    assert out_big.shape == (T2, B, AR_OUTPUT_SIZE)
    assert jnp.allclose(out_big, ref_big, atol=3e-2, rtol=3e-2)

    print("KERNEL_OK")
</pallas_src>

<mosaic_0001>
module attributes {stable_mosaic.version = 11 : i64} {
  func.func @_mlp_kernel(%arg0: i32, %arg1: memref<128x256xbf16, #tpu.memory_space<vmem>>, %arg2: memref<256x256xbf16, #tpu.memory_space<vmem>>, %arg3: memref<256x256xbf16, #tpu.memory_space<vmem>>, %arg4: memref<256x256xbf16, #tpu.memory_space<vmem>>, %arg5: memref<256x256xbf16, #tpu.memory_space<vmem>>, %arg6: memref<256x128xbf16, #tpu.memory_space<vmem>>, %arg7: memref<5x256xf32, #tpu.memory_space<vmem>>, %arg8: memref<128x128xf32, #tpu.memory_space<vmem>>) attributes {dimension_semantics = [#tpu.dimension_semantics<parallel>], iteration_bounds = array<i64: 1>, scalar_prefetch = 0 : i64, scratch_operands = 0 : i64, tpu.core_type = #tpu.core_type<tc>, window_params = [{transform_indices = @transform_0, window_bounds = array<i64: 128, 256>}, {pipeline_mode = #tpu.pipeline_mode<synchronous>, transform_indices = @transform_1, window_bounds = array<i64: 256, 256>}, {pipeline_mode = #tpu.pipeline_mode<synchronous>, transform_indices = @transform_2, window_bounds = array<i64: 256, 256>}, {pipeline_mode = #tpu.pipeline_mode<synchronous>, transform_indices = @transform_3, window_bounds = array<i64: 256, 256>}, {pipeline_mode = #tpu.pipeline_mode<synchronous>, transform_indices = @transform_4, window_bounds = array<i64: 256, 256>}, {pipeline_mode = #tpu.pipeline_mode<synchronous>, transform_indices = @transform_5, window_bounds = array<i64: 256, 128>}, {pipeline_mode = #tpu.pipeline_mode<synchronous>, transform_indices = @transform_6, window_bounds = array<i64: 5, 256>}, {transform_indices = @transform_7, window_bounds = array<i64: 128, 128>}]} {
    %c0 = arith.constant 0 : index
    %c0_0 = arith.constant 0 : index
    %0 = vector.load %arg1[%c0, %c0_0] : memref<128x256xbf16, #tpu.memory_space<vmem>>, vector<64x256xbf16>
    %c64 = arith.constant 64 : index
    %c0_1 = arith.constant 0 : index
    %1 = vector.load %arg1[%c64, %c0_1] : memref<128x256xbf16, #tpu.memory_space<vmem>>, vector<64x256xbf16>
    %c0_2 = arith.constant 0 : index
    %c0_3 = arith.constant 0 : index
    %2 = vector.load %arg2[%c0_2, %c0_3] : memref<256x256xbf16, #tpu.memory_space<vmem>>, vector<256x256xbf16>
    %c0_4 = arith.constant 0 : index
    %c0_5 = arith.constant 0 : index
    %3 = vector.load %arg7[%c0_4, %c0_5] : memref<5x256xf32, #tpu.memory_space<vmem>>, vector<1x256xf32>
    %cst = arith.constant dense<0.000000e+00> : vector<64x256xf32>
    %4 = tpu.matmul %0, %2, %cst {dimension_numbers = #tpu.dot_dimension_numbers<[1], [0], [0], [1], [0, 0, 1, 1], [], []>} : vector<64x256xbf16>, vector<256x256xbf16>, vector<64x256xf32> -> vector<64x256xf32>
    %cst_6 = arith.constant dense<0.000000e+00> : vector<64x256xf32>
    %5 = tpu.matmul %1, %2, %cst_6 {dimension_numbers = #tpu.dot_dimension_numbers<[1], [0], [0], [1], [0, 0, 1, 1], [], []>} : vector<64x256xbf16>, vector<256x256xbf16>, vector<64x256xf32> -> vector<64x256xf32>
    %6 = vector.broadcast %3 : vector<1x256xf32> to vector<64x256xf32>
    %7 = arith.addf %4, %6 : vector<64x256xf32>
    %cst_7 = arith.constant 1.000000e-01 : f32
    %8 = vector.broadcast %cst_7 : f32 to vector<64x256xf32>
    %9 = arith.mulf %8, %7 : vector<64x256xf32>
    %10 = arith.maximumf %7, %9 : vector<64x256xf32>
    %11 = arith.truncf %10 : vector<64x256xf32> to vector<64x256xbf16>
    %12 = vector.broadcast %3 : vector<1x256xf32> to vector<64x256xf32>
    %13 = arith.addf %5, %12 : vector<64x256xf32>
    %cst_8 = arith.constant 1.000000e-01 : f32
    %14 = vector.broadcast %cst_8 : f32 to vector<64x256xf32>
    %15 = arith.mulf %14, %13 : vector<64x256xf32>
    %16 = arith.maximumf %13, %15 : vector<64x256xf32>
    %17 = arith.truncf %16 : vector<64x256xf32> to vector<64x256xbf16>
    %c0_9 = arith.constant 0 : index
    %c0_10 = arith.constant 0 : index
    %18 = vector.load %arg3[%c0_9, %c0_10] : memref<256x256xbf16, #tpu.memory_space<vmem>>, vector<256x256xbf16>
    %c1 = arith.constant 1 : index
    %c0_11 = arith.constant 0 : index
    %19 = vector.load %arg7[%c1, %c0_11] : memref<5x256xf32, #tpu.memory_space<vmem>>, vector<1x256xf32>
    %cst_12 = arith.constant dense<0.000000e+00> : vector<64x256xf32>
    %20 = tpu.matmul %11, %18, %cst_12 {dimension_numbers = #tpu.dot_dimension_numbers<[1], [0], [0], [1], [0, 0, 1, 1], [], []>} : vector<64x256xbf16>, vector<256x256xbf16>, vector<64x256xf32> -> vector<64x256xf32>
    %cst_13 = arith.constant dense<0.000000e+00> : vector<64x256xf32>
    %21 = tpu.matmul %17, %18, %cst_13 {dimension_numbers = #tpu.dot_dimension_numbers<[1], [0], [0], [1], [0, 0, 1, 1], [], []>} : vector<64x256xbf16>, vector<256x256xbf16>, vector<64x256xf32> -> vector<64x256xf32>
    %22 = vector.broadcast %19 : vector<1x256xf32> to vector<64x256xf32>
    %23 = arith.addf %20, %22 : vector<64x256xf32>
    %cst_14 = arith.constant 1.000000e-01 : f32
    %24 = vector.broadcast %cst_14 : f32 to vector<64x256xf32>
    %25 = arith.mulf %24, %23 : vector<64x256xf32>
    %26 = arith.maximumf %23, %25 : vector<64x256xf32>
    %27 = arith.truncf %26 : vector<64x256xf32> to vector<64x256xbf16>
    %28 = vector.broadcast %19 : vector<1x256xf32> to vector<64x256xf32>
    %29 = arith.addf %21, %28 : vector<64x256xf32>
    %cst_15 = arith.constant 1.000000e-01 : f32
    %30 = vector.broadcast %cst_15 : f32 to vector<64x256xf32>
    %31 = arith.mulf %30, %29 : vector<64x256xf32>
    %32 = arith.maximumf %29, %31 : vector<64x256xf32>
    %33 = arith.truncf %32 : vector<64x256xf32> to vector<64x256xbf16>
    %c0_16 = arith.constant 0 : index
    %c0_17 = arith.constant 0 : index
    %34 = vector.load %arg4[%c0_16, %c0_17] : memref<256x256xbf16, #tpu.memory_space<vmem>>, vector<256x256xbf16>
    %c2 = arith.constant 2 : index
    %c0_18 = arith.constant 0 : index
    %35 = vector.load %arg7[%c2, %c0_18] : memref<5x256xf32, #tpu.memory_space<vmem>>, vector<1x256xf32>
    %cst_19 = arith.constant dense<0.000000e+00> : vector<64x256xf32>
    %36 = tpu.matmul %27, %34, %cst_19 {dimension_numbers = #tpu.dot_dimension_numbers<[1], [0], [0], [1], [0, 0, 1, 1], [], []>} : vector<64x256xbf16>, vector<256x256xbf16>, vector<64x256xf32> -> vector<64x256xf32>
    %cst_20 = arith.constant dense<0.000000e+00> : vector<64x256xf32>
    %37 = tpu.matmul %33, %34, %cst_20 {dimension_numbers = #tpu.dot_dimension_numbers<[1], [0], [0], [1], [0, 0, 1, 1], [], []>} : vector<64x256xbf16>, vector<256x256xbf16>, vector<64x256xf32> -> vector<64x256xf32>
    %38 = vector.broadcast %35 : vector<1x256xf32> to vector<64x256xf32>
    %39 = arith.addf %36, %38 : vector<64x256xf32>
    %cst_21 = arith.constant 1.000000e-01 : f32
    %40 = vector.broadcast %cst_21 : f32 to vector<64x256xf32>
    %41 = arith.mulf %40, %39 : vector<64x256xf32>
    %42 = arith.maximumf %39, %41 : vector<64x256xf32>
    %43 = arith.truncf %42 : vector<64x256xf32> to vector<64x256xbf16>
    %44 = vector.broadcast %35 : vector<1x256xf32> to vector<64x256xf32>
    %45 = arith.addf %37, %44 : vector<64x256xf32>
    %cst_22 = arith.constant 1.000000e-01 : f32
    %46 = vector.broadcast %cst_22 : f32 to vector<64x256xf32>
    %47 = arith.mulf %46, %45 : vector<64x256xf32>
    %48 = arith.maximumf %45, %47 : vector<64x256xf32>
    %49 = arith.truncf %48 : vector<64x256xf32> to vector<64x256xbf16>
    %c0_23 = arith.constant 0 : index
    %c0_24 = arith.constant 0 : index
    %50 = vector.load %arg5[%c0_23, %c0_24] : memref<256x256xbf16, #tpu.memory_space<vmem>>, vector<256x256xbf16>
    %c3 = arith.constant 3 : index
    %c0_25 = arith.constant 0 : index
    %51 = vector.load %arg7[%c3, %c0_25] : memref<5x256xf32, #tpu.memory_space<vmem>>, vector<1x256xf32>
    %cst_26 = arith.constant dense<0.000000e+00> : vector<64x256xf32>
    %52 = tpu.matmul %43, %50, %cst_26 {dimension_numbers = #tpu.dot_dimension_numbers<[1], [0], [0], [1], [0, 0, 1, 1], [], []>} : vector<64x256xbf16>, vector<256x256xbf16>, vector<64x256xf32> -> vector<64x256xf32>
    %cst_27 = arith.constant dense<0.000000e+00> : vector<64x256xf32>
    %53 = tpu.matmul %49, %50, %cst_27 {dimension_numbers = #tpu.dot_dimension_numbers<[1], [0], [0], [1], [0, 0, 1, 1], [], []>} : vector<64x256xbf16>, vector<256x256xbf16>, vector<64x256xf32> -> vector<64x256xf32>
    %54 = vector.broadcast %51 : vector<1x256xf32> to vector<64x256xf32>
    %55 = arith.addf %52, %54 : vector<64x256xf32>
    %cst_28 = arith.constant 1.000000e-01 : f32
    %56 = vector.broadcast %cst_28 : f32 to vector<64x256xf32>
    %57 = arith.mulf %56, %55 : vector<64x256xf32>
    %58 = arith.maximumf %55, %57 : vector<64x256xf32>
    %59 = arith.truncf %58 : vector<64x256xf32> to vector<64x256xbf16>
    %60 = vector.broadcast %51 : vector<1x256xf32> to vector<64x256xf32>
    %61 = arith.addf %53, %60 : vector<64x256xf32>
    %cst_29 = arith.constant 1.000000e-01 : f32
    %62 = vector.broadcast %cst_29 : f32 to vector<64x256xf32>
    %63 = arith.mulf %62, %61 : vector<64x256xf32>
    %64 = arith.maximumf %61, %63 : vector<64x256xf32>
    %65 = arith.truncf %64 : vector<64x256xf32> to vector<64x256xbf16>
    %c0_30 = arith.constant 0 : index
    %c0_31 = arith.constant 0 : index
    %66 = vector.load %arg6[%c0_30, %c0_31] : memref<256x128xbf16, #tpu.memory_space<vmem>>, vector<256x128xbf16>
    %c4 = arith.constant 4 : index
    %c0_32 = arith.constant 0 : index
    %67 = vector.load %arg7[%c4, %c0_32] : memref<5x256xf32, #tpu.memory_space<vmem>>, vector<1x128xf32>
    %cst_33 = arith.constant dense<0.000000e+00> : vector<64x128xf32>
    %68 = tpu.matmul %59, %66, %cst_33 {dimension_numbers = #tpu.dot_dimension_numbers<[1], [0], [0], [1], [0, 0, 1, 1], [], []>} : vector<64x256xbf16>, vector<256x128xbf16>, vector<64x128xf32> -> vector<64x128xf32>
    %69 = vector.broadcast %67 : vector<1x128xf32> to vector<64x128xf32>
    %70 = arith.addf %68, %69 : vector<64x128xf32>
    %cst_34 = arith.constant dense<0.000000e+00> : vector<64x128xf32>
    %71 = tpu.matmul %65, %66, %cst_34 {dimension_numbers = #tpu.dot_dimension_numbers<[1], [0], [0], [1], [0, 0, 1, 1], [], []>} : vector<64x256xbf16>, vector<256x128xbf16>, vector<64x128xf32> -> vector<64x128xf32>
    %72 = vector.broadcast %67 : vector<1x128xf32> to vector<64x128xf32>
    %73 = arith.addf %71, %72 : vector<64x128xf32>
    %c0_35 = arith.constant 0 : index
    %c0_36 = arith.constant 0 : index
    %74 = vector.load %arg8[%c0_35, %c0_36] : memref<128x128xf32, #tpu.memory_space<vmem>>, vector<64x128xf32>
    tpu.vector_store %arg8[%c0_35, %c0_36], %70 {strides = array<i32>} : memref<128x128xf32, #tpu.memory_space<vmem>>, vector<64x128xf32>,
    %c64_37 = arith.constant 64 : index
    %c0_38 = arith.constant 0 : index
    %75 = vector.load %arg8[%c64_37, %c0_38] : memref<128x128xf32, #tpu.memory_space<vmem>>, vector<64x128xf32>
    tpu.vector_store %arg8[%c64_37, %c0_38], %73 {strides = array<i32>} : memref<128x128xf32, #tpu.memory_space<vmem>>, vector<64x128xf32>,
    return
  }
  func.func @transform_0(%arg0: i32) -> (i32, i32) {
    %c0_i32 = arith.constant 0 : i32
    %c0_i32_0 = arith.constant 0 : i32
    return %arg0, %c0_i32 : i32, i32
  }
  func.func @transform_1(%arg0: i32) -> (i32, i32) {
    %c0_i32 = arith.constant 0 : i32
    %c0_i32_0 = arith.constant 0 : i32
    %c0_i32_1 = arith.constant 0 : i32
    return %c0_i32, %c0_i32_0 : i32, i32
  }
  func.func @transform_2(%arg0: i32) -> (i32, i32) {
    %c0_i32 = arith.constant 0 : i32
    %c0_i32_0 = arith.constant 0 : i32
    %c0_i32_1 = arith.constant 0 : i32
    return %c0_i32, %c0_i32_0 : i32, i32
  }
  func.func @transform_3(%arg0: i32) -> (i32, i32) {
    %c0_i32 = arith.constant 0 : i32
    %c0_i32_0 = arith.constant 0 : i32
    %c0_i32_1 = arith.constant 0 : i32
    return %c0_i32, %c0_i32_0 : i32, i32
  }
  func.func @transform_4(%arg0: i32) -> (i32, i32) {
    %c0_i32 = arith.constant 0 : i32
    %c0_i32_0 = arith.constant 0 : i32
    %c0_i32_1 = arith.constant 0 : i32
    return %c0_i32, %c0_i32_0 : i32, i32
  }
  func.func @transform_5(%arg0: i32) -> (i32, i32) {
    %c0_i32 = arith.constant 0 : i32
    %c0_i32_0 = arith.constant 0 : i32
    %c0_i32_1 = arith.constant 0 : i32
    return %c0_i32, %c0_i32_0 : i32, i32
  }
  func.func @transform_6(%arg0: i32) -> (i32, i32) {
    %c0_i32 = arith.constant 0 : i32
    %c0_i32_0 = arith.constant 0 : i32
    %c0_i32_1 = arith.constant 0 : i32
    return %c0_i32, %c0_i32_0 : i32, i32
  }
  func.func @transform_7(%arg0: i32) -> (i32, i32) {
    %c0_i32 = arith.constant 0 : i32
    %c0_i32_0 = arith.constant 0 : i32
    return %arg0, %c0_i32 : i32, i32
  }
}

</mosaic_0001>

<llo_original>
// kernel: autoregressive_forward.1
$region0: #{autoregressive_forward.1}
  #allocation0 [shape = 'u32[]', space=smem, size = 0x4, offset = 0x4, fixed_abs, tag = 'smem constant byte address 0x4 - core index']
  #allocation1 [shape = 'u32[144,128]{1,0:T(1,128)}', space=vmem, size = 0x12000, scoped, tag = 'internal scratch']
  %s0 = inlined_call_operand.vmem [shape: bf16[128,256], index: 0, kind: input, shape index: {}]
  %s1 = inlined_call_operand.vmem [shape: bf16[256,256], index: 1, kind: input, shape index: {}]
  %s2 = inlined_call_operand.vmem [shape: bf16[256,256], index: 2, kind: input, shape index: {}]
  %s3 = inlined_call_operand.vmem [shape: bf16[256,256], index: 3, kind: input, shape index: {}]
  %s4 = inlined_call_operand.vmem [shape: bf16[256,256], index: 4, kind: input, shape index: {}]
  %s5 = inlined_call_operand.vmem [shape: bf16[256,128], index: 5, kind: input, shape index: {}]
  %s6 = inlined_call_operand.vmem [shape: f32[5,256], index: 6, kind: input, shape index: {}]
  %s7 = inlined_call_operand.vmem [shape: f32[128,128], index: 7, kind: output, shape index: {}]
  %s8 = sld [smem:[#allocation0]]
  $region38: #{autoregressive_forward.1} parent=0
    _
  %s10 = ssub.s32 1, %s8
  %s11 = scalar_select 0, %s10, %s8
  // Predicated region
  $region2: #{autoregressive_forward.1} parent=0 // pred_check
    _
  $region3: #{autoregressive_forward.1} parent=0 // pred_check_branch
    %13 = sbr.rel (0) target = $region5
  $region4: #{autoregressive_forward.1} parent=0 // pred_region
    _
  $region5: #{autoregressive_forward.1} parent=0 // pred_fallthru
    _
  // Predicated region
  $region6: #{autoregressive_forward.1} parent=0 // pred_check
    _
  $region7: #{autoregressive_forward.1} parent=0 // pred_check_branch
    %15 = sbr.rel (0) target = $region9
  $region8: #{autoregressive_forward.1} parent=0 // pred_region
    _
  $region9: #{autoregressive_forward.1} parent=0 // pred_fallthru
    _
  // Predicated region
  $region10: #{autoregressive_forward.1} parent=0 // pred_check
    _
  $region11: #{autoregressive_forward.1} parent=0 // pred_check_branch
    %17 = sbr.rel (0) target = $region13
  $region12: #{autoregressive_forward.1} parent=0 // pred_region
    _
  $region13: #{autoregressive_forward.1} parent=0 // pred_fallthru
    _
  // Predicated region
  $region14: #{autoregressive_forward.1} parent=0 // pred_check
    _
  $region15: #{autoregressive_forward.1} parent=0 // pred_check_branch
    %19 = sbr.rel (0) target = $region17
  $region16: #{autoregressive_forward.1} parent=0 // pred_region
    _
  $region17: #{autoregressive_forward.1} parent=0 // pred_fallthru
    _
  // Predicated region
  $region18: #{autoregressive_forward.1} parent=0 // pred_check
    _
  $region19: #{autoregressive_forward.1} parent=0 // pred_check_branch
    %21 = sbr.rel (0) target = $region21
  $region20: #{autoregressive_forward.1} parent=0 // pred_region
    _
  $region21: #{autoregressive_forward.1} parent=0 // pred_fallthru
    _
  // Predicated region
  $region22: #{autoregressive_forward.1} parent=0 // pred_check
    _
  $region23: #{autoregressive_forward.1} parent=0 // pred_check_branch
    %23 = sbr.rel (0) target = $region25
  $region24: #{autoregressive_forward.1} parent=0 // pred_region
    _
  $region25: #{autoregressive_forward.1} parent=0 // pred_fallthru
    _
  // Predicated region
  $region26: #{autoregressive_forward.1} parent=0 // pred_check
    _
  $region27: #{autoregressive_forward.1} parent=0 // pred_check_branch
    %25 = sbr.rel (0) target = $region29
  $region28: #{autoregressive_forward.1} parent=0 // pred_region
    _
  $region29: #{autoregressive_forward.1} parent=0 // pred_fallthru
    _
  %v27 = vld [vmem:[%s0] sm:$0xff]
  %v28 = vld [vmem:[%s0 + $0x8] sm:$0xff]
  %v29 = vld [vmem:[%s0 + $0x10] sm:$0xff]
  %v30 = vld [vmem:[%s0 + $0x18] sm:$0xff]
  %v31 = vld [vmem:[%s0 + $0x20] sm:$0xff]
  %v32 = vld [vmem:[%s0 + $0x28] sm:$0xff]
  %v33 = vld [vmem:[%s0 + $0x30] sm:$0xff]
  %v34 = vld [vmem:[%s0 + $0x38] sm:$0xff]
  %v35 = vld [vmem:[%s0 + $0x40] sm:$0xff]
  %v36 = vld [vmem:[%s0 + $0x48] sm:$0xff]
  %v37 = vld [vmem:[%s0 + $0x50] sm:$0xff]
  %v38 = vld [vmem:[%s0 + $0x58] sm:$0xff]
  %v39 = vld [vmem:[%s0 + $0x60] sm:$0xff]
  %v40 = vld [vmem:[%s0 + $0x68] sm:$0xff]
  %v41 = vld [vmem:[%s0 + $0x70] sm:$0xff]
  %v42 = vld [vmem:[%s0 + $0x78] sm:$0xff]
  %v43 = vld [vmem:[%s1] sm:$0xff]
  %v44 = vld [vmem:[%s1 + $0x8] sm:$0xff]
  %v45 = vld [vmem:[%s1 + $0x10] sm:$0xff]
  %v46 = vld [vmem:[%s1 + $0x18] sm:$0xff]
  %v47 = vld [vmem:[%s1 + $0x20] sm:$0xff]
  %v48 = vld [vmem:[%s1 + $0x28] sm:$0xff]
  %v49 = vld [vmem:[%s1 + $0x30] sm:$0xff]
  %v50 = vld [vmem:[%s1 + $0x38] sm:$0xff]
  %v51 = vld [vmem:[%s1 + $0x40] sm:$0xff]
  %v52 = vld [vmem:[%s1 + $0x48] sm:$0xff]
  %v53 = vld [vmem:[%s1 + $0x50] sm:$0xff]
  %v54 = vld [vmem:[%s1 + $0x58] sm:$0xff]
  %v55 = vld [vmem:[%s1 + $0x60] sm:$0xff]
  %v56 = vld [vmem:[%s1 + $0x68] sm:$0xff]
  %v57 = vld [vmem:[%s1 + $0x70] sm:$0xff]
  %v58 = vld [vmem:[%s1 + $0x78] sm:$0xff]
  %v59 = vld [vmem:[%s1 + $0x80] sm:$0xff]
  %v60 = vld [vmem:[%s1 + $0x88] sm:$0xff]
  %v61 = vld [vmem:[%s1 + $0x90] sm:$0xff]
  %v62 = vld [vmem:[%s1 + $0x98] sm:$0xff]
  %v63 = vld [vmem:[%s1 + $0xa0] sm:$0xff]
  %v64 = vld [vmem:[%s1 + $0xa8] sm:$0xff]
  %v65 = vld [vmem:[%s1 + $0xb0] sm:$0xff]
  %v66 = vld [vmem:[%s1 + $0xb8] sm:$0xff]
  %v67 = vld [vmem:[%s1 + $0xc0] sm:$0xff]
  %v68 = vld [vmem:[%s1 + $0xc8] sm:$0xff]
  %v69 = vld [vmem:[%s1 + $0xd0] sm:$0xff]
  %v70 = vld [vmem:[%s1 + $0xd8] sm:$0xff]
  %v71 = vld [vmem:[%s1 + $0xe0] sm:$0xff]
  %v72 = vld [vmem:[%s1 + $0xe8] sm:$0xff]
  %v73 = vld [vmem:[%s1 + $0xf0] sm:$0xff]
  %v74 = vld [vmem:[%s1 + $0xf8] sm:$0xff]
  %v75 = vld [vmem:[%s6] ss:$8 sm:$0x3]
  %v77 = vlaneseq
  %v78 = vshrl.u32 %v77, 7
  %v79 = vsub.s32 0, %v78
  %v80 = vrot.slane %v75, %v79
  %v81 = vlaneseq
  %v82 = vshrl.u32 %v81, 7
  %v83 = vsub.s32 1, %v82
  %v84 = vrot.slane %v75, %v83
  %v95 = vunpack.c.l.b16 %v27
  %v96 = vunpack.c.h.b16 %v27
  %v97 = vunpack.c.l.b16 %v28
  %v98 = vunpack.c.h.b16 %v28
  %v99 = vunpack.c.l.b16 %v29
  %v100 = vunpack.c.h.b16 %v29
  %v101 = vunpack.c.l.b16 %v30
  %v102 = vunpack.c.h.b16 %v30
  %v103 = vunpack.c.l.b16 %v31
  %v104 = vunpack.c.h.b16 %v31
  %v105 = vunpack.c.l.b16 %v32
  %v106 = vunpack.c.h.b16 %v32
  %v107 = vunpack.c.l.b16 %v33
  %v108 = vunpack.c.h.b16 %v33
  %v109 = vunpack.c.l.b16 %v34
  %v110 = vunpack.c.h.b16 %v34
  %v111 = vpack.c.b16 %v97, %v95
  %v112 = vpack.c.b16 %v98, %v96
  %v113 = vpack.c.b16 %v101, %v99
  %v114 = vpack.c.b16 %v102, %v100
  %v115 = vpack.c.b16 %v105, %v103
  %v116 = vpack.c.b16 %v106, %v104
  %v117 = vpack.c.b16 %v109, %v107
  %v118 = vpack.c.b16 %v110, %v108
  %v159 = vunpack.c.l.b16 %v43
  %v160 = vunpack.c.h.b16 %v43
  %v161 = vunpack.c.l.b16 %v44
  %v162 = vunpack.c.h.b16 %v44
  %v163 = vunpack.c.l.b16 %v45
  %v164 = vunpack.c.h.b16 %v45
  %v165 = vunpack.c.l.b16 %v46
  %v166 = vunpack.c.h.b16 %v46
  %v167 = vunpack.c.l.b16 %v47
  %v168 = vunpack.c.h.b16 %v47
  %v169 = vunpack.c.l.b16 %v48
  %v170 = vunpack.c.h.b16 %v48
  %v171 = vunpack.c.l.b16 %v49
  %v172 = vunpack.c.h.b16 %v49
  %v173 = vunpack.c.l.b16 %v50
  %v174 = vunpack.c.h.b16 %v50
  %v175 = vunpack.c.l.b16 %v51
  %v176 = vunpack.c.h.b16 %v51
  %v177 = vunpack.c.l.b16 %v52
  %v178 = vunpack.c.h.b16 %v52
  %v179 = vunpack.c.l.b16 %v53
  %v180 = vunpack.c.h.b16 %v53
  %v181 = vunpack.c.l.b16 %v54
  %v182 = vunpack.c.h.b16 %v54
  %v183 = vunpack.c.l.b16 %v55
  %v184 = vunpack.c.h.b16 %v55
  %v185 = vunpack.c.l.b16 %v56
  %v186 = vunpack.c.h.b16 %v56
  %v187 = vunpack.c.l.b16 %v57
  %v188 = vunpack.c.h.b16 %v57
  %v189 = vunpack.c.l.b16 %v58
  %v190 = vunpack.c.h.b16 %v58
  %v191 = vunpack.c.l.b16 %v59
  %v192 = vunpack.c.h.b16 %v59
  %v193 = vunpack.c.l.b16 %v60
  %v194 = vunpack.c.h.b16 %v60
  %v195 = vunpack.c.l.b16 %v61
  %v196 = vunpack.c.h.b16 %v61
  %v197 = vunpack.c.l.b16 %v62
  %v198 = vunpack.c.h.b16 %v62
  %v199 = vunpack.c.l.b16 %v63
  %v200 = vunpack.c.h.b16 %v63
  %v201 = vunpack.c.l.b16 %v64
  %v202 = vunpack.c.h.b16 %v64
  %v203 = vunpack.c.l.b16 %v65
  %v204 = vunpack.c.h.b16 %v65
  %v205 = vunpack.c.l.b16 %v66
  %v206 = vunpack.c.h.b16 %v66
  %v207 = vunpack.c.l.b16 %v67
  %v208 = vunpack.c.h.b16 %v67
  %v209 = vunpack.c.l.b16 %v68
  %v210 = vunpack.c.h.b16 %v68
  %v211 = vunpack.c.l.b16 %v69
  %v212 = vunpack.c.h.b16 %v69
  %v213 = vunpack.c.l.b16 %v70
  %v214 = vunpack.c.h.b16 %v70
  %v215 = vunpack.c.l.b16 %v71
  %v216 = vunpack.c.h.b16 %v71
  %v217 = vunpack.c.l.b16 %v72
  %v218 = vunpack.c.h.b16 %v72
  %v219 = vunpack.c.l.b16 %v73
  %v220 = vunpack.c.h.b16 %v73
  %v221 = vunpack.c.l.b16 %v74
  %v222 = vunpack.c.h.b16 %v74
  %v223 = vpack.c.b16 %v161, %v159
  %v224 = vpack.c.b16 %v162, %v160
  %v225 = vpack.c.b16 %v165, %v163
  %v226 = vpack.c.b16 %v166, %v164
  %v227 = vpack.c.b16 %v169, %v167
  %v228 = vpack.c.b16 %v170, %v168
  %v229 = vpack.c.b16 %v173, %v171
  %v230 = vpack.c.b16 %v174, %v172
  %v231 = vpack.c.b16 %v177, %v175
  %v232 = vpack.c.b16 %v178, %v176
  %v233 = vpack.c.b16 %v181, %v179
  %v234 = vpack.c.b16 %v182, %v180
  %v235 = vpack.c.b16 %v185, %v183
  %v236 = vpack.c.b16 %v186, %v184
  %v237 = vpack.c.b16 %v189, %v187
  %v238 = vpack.c.b16 %v190, %v188
  %v239 = vpack.c.b16 %v193, %v191
  %v240 = vpack.c.b16 %v194, %v192
  %v241 = vpack.c.b16 %v197, %v195
  %v242 = vpack.c.b16 %v198, %v196
  %v243 = vpack.c.b16 %v201, %v199
  %v244 = vpack.c.b16 %v202, %v200
  %v245 = vpack.c.b16 %v205, %v203
  %v246 = vpack.c.b16 %v206, %v204
  %v247 = vpack.c.b16 %v209, %v207
  %v248 = vpack.c.b16 %v210, %v208
  %v249 = vpack.c.b16 %v213, %v211
  %v250 = vpack.c.b16 %v214, %v212
  %v251 = vpack.c.b16 %v217, %v215
  %v252 = vpack.c.b16 %v218, %v216
  %v253 = vpack.c.b16 %v221, %v219
  %v254 = vpack.c.b16 %v222, %v220
  %287 = vmatprep.subr.bf16.mxu0 %v224
  %288 = vmatpush1.bf16.msra.mxu0 %v223
  %289 = vmatprep.subr.bf16.mxu0 %v226
  %290 = vmatpush1.bf16.msra.mxu0 %v225
  %291 = vmatprep.subr.bf16.mxu0 %v228
  %292 = vmatpush1.bf16.msra.mxu0 %v227
  %293 = vmatprep.subr.bf16.mxu0 %v230
  %294 = vmatpush1.bf16.msra.mxu0 %v229
  %295 = vmatprep.subr.bf16.mxu0 %v232
  %296 = vmatpush1.bf16.msra.mxu0 %v231
  %297 = vmatprep.subr.bf16.mxu0 %v234
  %298 = vmatpush1.bf16.msra.mxu0 %v233
  %299 = vmatprep.subr.bf16.mxu0 %v236
  %300 = vmatpush1.bf16.msra.mxu0 %v235
  %301 = vmatprep.subr.bf16.mxu0 %v238
  %302 = vmatpush1.bf16.msra.mxu0 %v237
  %303 = vmatprep.subr.bf16.mxu0 %v240
  %304 = vmatpush1.bf16.msra.mxu0 %v239
  %305 = vmatprep.subr.bf16.mxu0 %v242
  %306 = vmatpush1.bf16.msra.mxu0 %v241
  %307 = vmatprep.subr.bf16.mxu0 %v244
  %308 = vmatpush1.bf16.msra.mxu0 %v243
  %309 = vmatprep.subr.bf16.mxu0 %v246
  %310 = vmatpush1.bf16.msra.mxu0 %v245
  %311 = vmatprep.subr.bf16.mxu0 %v248
  %312 = vmatpush1.bf16.msra.mxu0 %v247
  %313 = vmatprep.subr.bf16.mxu0 %v250
  %314 = vmatpush1.bf16.msra.mxu0 %v249
  %315 = vmatprep.subr.bf16.mxu0 %v252
  %316 = vmatpush1.bf16.msra.mxu0 %v251
  %317 = vmatprep.subr.bf16.mxu0 %v254
  %318 = vmatpush1.bf16.msra.mxu0 %v253
  %319 = vmatprep.mubr.bf16.mxu0 %v112
  %320 = vmatmul.mubr.bf16.gmra.mrb[0].mxu0 %v111
  %v321 = vpop.f32.mrb[0].mxu0
  %v322 = vadd.f32 %v80, %v321
  %v323 = vpop.f32.mrb[0].mxu0
  %v324 = vadd.f32 %v84, %v323
  %v325 = vpop.f32.mrb[0].mxu0
  %v326 = vadd.f32 %v80, %v325
  %v327 = vpop.f32.mrb[0].mxu0
  %v328 = vadd.f32 %v84, %v327
  %329 = vmatprep.mubr.bf16.mxu0 %v114
  %330 = vmatmul.mubr.bf16.gmra.mrb[0].mxu0 %v113
  %v331 = vpop.f32.mrb[0].mxu0
  %v332 = vadd.f32 %v80, %v331
  %v333 = vpop.f32.mrb[0].mxu0
  %v334 = vadd.f32 %v84, %v333
  %v335 = vpop.f32.mrb[0].mxu0
  %v336 = vadd.f32 %v80, %v335
  %v337 = vpop.f32.mrb[0].mxu0
  %v338 = vadd.f32 %v84, %v337
  %339 = vmatprep.mubr.bf16.mxu0 %v116
  %340 = vmatmul.mubr.bf16.gmra.mrb[0].mxu0 %v115
  %v341 = vpop.f32.mrb[0].mxu0
  %v342 = vadd.f32 %v80, %v341
  %v343 = vpop.f32.mrb[0].mxu0
  %v344 = vadd.f32 %v84, %v343
  %v345 = vpop.f32.mrb[0].mxu0
  %v346 = vadd.f32 %v80, %v345
  %v347 = vpop.f32.mrb[0].mxu0
  %v348 = vadd.f32 %v84, %v347
  %349 = vmatprep.mubr.bf16.mxu0 %v118
  %350 = vmatmul.mubr.bf16.gmra.mrb[0].mxu0 %v117
  %v351 = vpop.f32.mrb[0].mxu0
  %v352 = vadd.f32 %v80, %v351
  %v353 = vpop.f32.mrb[0].mxu0
  %v354 = vadd.f32 %v84, %v353
  %v355 = vpop.f32.mrb[0].mxu0
  %v356 = vadd.f32 %v80, %v355
  %v357 = vpop.f32.mrb[0].mxu0
  %v358 = vadd.f32 %v84, %v357
  %359 = vdwg.mxu0
  %v360 = vmul.f32 %v322, 0.1
  %v361 = vmul.f32 %v324, 0.1
  %v362 = vmul.f32 %v326, 0.1
  %v363 = vmul.f32 %v328, 0.1
  %v364 = vmul.f32 %v332, 0.1
  %v365 = vmul.f32 %v334, 0.1
  %v366 = vmul.f32 %v336, 0.1
  %v367 = vmul.f32 %v338, 0.1
  %v368 = vmul.f32 %v342, 0.1
  %v369 = vmul.f32 %v344, 0.1
  %v370 = vmul.f32 %v346, 0.1
  %v371 = vmul.f32 %v348, 0.1
  %v372 = vmul.f32 %v352, 0.1
  %v373 = vmul.f32 %v354, 0.1
  %v374 = vmul.f32 %v356, 0.1
  %v375 = vmul.f32 %v358, 0.1
  %v376 = vmax.f32 %v322, %v360
  %v377 = vmax.f32 %v324, %v361
  %v378 = vmax.f32 %v326, %v362
  %v379 = vmax.f32 %v328, %v363
  %v380 = vmax.f32 %v332, %v364
  %v381 = vmax.f32 %v334, %v365
  %v382 = vmax.f32 %v336, %v366
  %v383 = vmax.f32 %v338, %v367
  %v384 = vmax.f32 %v342, %v368
  %v385 = vmax.f32 %v344, %v369
  %v386 = vmax.f32 %v346, %v370
  %v387 = vmax.f32 %v348, %v371
  %v388 = vmax.f32 %v352, %v372
  %v389 = vmax.f32 %v354, %v373
  %v390 = vmax.f32 %v356, %v374
  %v391 = vmax.f32 %v358, %v375
  %v392 = vpack.c.bf16 %v378, %v376
  %v393 = vpack.c.bf16 %v379, %v377
  %v394 = vpack.c.bf16 %v382, %v380
  %v395 = vpack.c.bf16 %v383, %v381
  %v396 = vpack.c.bf16 %v386, %v384
  %v397 = vpack.c.bf16 %v387, %v385
  %v398 = vpack.c.bf16 %v390, %v388
  %v399 = vpack.c.bf16 %v391, %v389
  %v408 = vunpack.c.l.b16 %v35
  %v409 = vunpack.c.h.b16 %v35
  %v410 = vunpack.c.l.b16 %v36
  %v411 = vunpack.c.h.b16 %v36
  %v412 = vunpack.c.l.b16 %v37
  %v413 = vunpack.c.h.b16 %v37
  %v414 = vunpack.c.l.b16 %v38
  %v415 = vunpack.c.h.b16 %v38
  %v416 = vunpack.c.l.b16 %v39
  %v417 = vunpack.c.h.b16 %v39
  %v418 = vunpack.c.l.b16 %v40
  %v419 = vunpack.c.h.b16 %v40
  %v420 = vunpack.c.l.b16 %v41
  %v421 = vunpack.c.h.b16 %v41
  %v422 = vunpack.c.l.b16 %v42
  %v423 = vunpack.c.h.b16 %v42
  %v424 = vpack.c.b16 %v410, %v408
  %v425 = vpack.c.b16 %v411, %v409
  %v426 = vpack.c.b16 %v414, %v412
  %v427 = vpack.c.b16 %v415, %v413
  %v428 = vpack.c.b16 %v418, %v416
  %v429 = vpack.c.b16 %v419, %v417
  %v430 = vpack.c.b16 %v422, %v420
  %v431 = vpack.c.b16 %v423, %v421
  %440 = vmatprep.subr.bf16.mxu0 %v224
  %441 = vmatpush1.bf16.msra.mxu0 %v223
  %442 = vmatprep.subr.bf16.mxu0 %v226
  %443 = vmatpush1.bf16.msra.mxu0 %v225
  %444 = vmatprep.subr.bf16.mxu0 %v228
  %445 = vmatpush1.bf16.msra.mxu0 %v227
  %446 = vmatprep.subr.bf16.mxu0 %v230
  %447 = vmatpush1.bf16.msra.mxu0 %v229
  %448 = vmatprep.subr.bf16.mxu0 %v232
  %449 = vmatpush1.bf16.msra.mxu0 %v231
  %450 = vmatprep.subr.bf16.mxu0 %v234
  %451 = vmatpush1.bf16.msra.mxu0 %v233
  %452 = vmatprep.subr.bf16.mxu0 %v236
  %453 = vmatpush1.bf16.msra.mxu0 %v235
  %454 = vmatprep.subr.bf16.mxu0 %v238
  %455 = vmatpush1.bf16.msra.mxu0 %v237
  %456 = vmatprep.subr.bf16.mxu0 %v240
  %457 = vmatpush1.bf16.msra.mxu0 %v239
  %458 = vmatprep.subr.bf16.mxu0 %v242
  %459 = vmatpush1.bf16.msra.mxu0 %v241
  %460 = vmatprep.subr.bf16.mxu0 %v244
  %461 = vmatpush1.bf16.msra.mxu0 %v243
  %462 = vmatprep.subr.bf16.mxu0 %v246
  %463 = vmatpush1.bf16.msra.mxu0 %v245
  %464 = vmatprep.subr.bf16.mxu0 %v248
  %465 = vmatpush1.bf16.msra.mxu0 %v247
  %466 = vmatprep.subr.bf16.mxu0 %v250
  %467 = vmatpush1.bf16.msra.mxu0 %v249
  %468 = vmatprep.subr.bf16.mxu0 %v252
  %469 = vmatpush1.bf16.msra.mxu0 %v251
  %470 = vmatprep.subr.bf16.mxu0 %v254
  %471 = vmatpush1.bf16.msra.mxu0 %v253
  %472 = vmatprep.mubr.bf16.mxu0 %v425
  %473 = vmatmul.mubr.bf16.gmra.mrb[0].mxu0 %v424
  %v474 = vpop.f32.mrb[0].mxu0
  %v475 = vadd.f32 %v80, %v474
  %v476 = vpop.f32.mrb[0].mxu0
  %v477 = vadd.f32 %v84, %v476
  %v478 = vpop.f32.mrb[0].mxu0
  %v479 = vadd.f32 %v80, %v478
  %v480 = vpop.f32.mrb[0].mxu0
  %v481 = vadd.f32 %v84, %v480
  %482 = vmatprep.mubr.bf16.mxu0 %v427
  %483 = vmatmul.mubr.bf16.gmra.mrb[0].mxu0 %v426
  %v484 = vpop.f32.mrb[0].mxu0
  %v485 = vadd.f32 %v80, %v484
  %v486 = vpop.f32.mrb[0].mxu0
  %v487 = vadd.f32 %v84, %v486
  %v488 = vpop.f32.mrb[0].mxu0
  %v489 = vadd.f32 %v80, %v488
  %v490 = vpop.f32.mrb[0].mxu0
  %v491 = vadd.f32 %v84, %v490
  %492 = vmatprep.mubr.bf16.mxu0 %v429
  %493 = vmatmul.mubr.bf16.gmra.mrb[0].mxu0 %v428
  %v494 = vpop.f32.mrb[0].mxu0
  %v495 = vadd.f32 %v80, %v494
  %v496 = vpop.f32.mrb[0].mxu0
  %v497 = vadd.f32 %v84, %v496
  %v498 = vpop.f32.mrb[0].mxu0
  %v499 = vadd.f32 %v80, %v498
  %v500 = vpop.f32.mrb[0].mxu0
  %v501 = vadd.f32 %v84, %v500
  %502 = vmatprep.mubr.bf16.mxu0 %v431
  %503 = vmatmul.mubr.bf16.gmra.mrb[0].mxu0 %v430
  %v504 = vpop.f32.mrb[0].mxu0
  %v505 = vadd.f32 %v80, %v504
  %v506 = vpop.f32.mrb[0].mxu0
  %v507 = vadd.f32 %v84, %v506
  %v508 = vpop.f32.mrb[0].mxu0
  %v509 = vadd.f32 %v80, %v508
  %v510 = vpop.f32.mrb[0].mxu0
  %v511 = vadd.f32 %v84, %v510
  %512 = vdwg.mxu0
  %v513 = vmul.f32 %v475, 0.1
  %v514 = vmul.f32 %v477, 0.1
  %v515 = vmul.f32 %v479, 0.1
  %v516 = vmul.f32 %v481, 0.1
  %v517 = vmul.f32 %v485, 0.1
  %v518 = vmul.f32 %v487, 0.1
  %v519 = vmul.f32 %v489, 0.1
  %v520 = vmul.f32 %v491, 0.1
  %v521 = vmul.f32 %v495, 0.1
  %v522 = vmul.f32 %v497, 0.1
  %v523 = vmul.f32 %v499, 0.1
  %v524 = vmul.f32 %v501, 0.1
  %v525 = vmul.f32 %v505, 0.1
  %v526 = vmul.f32 %v507, 0.1
  %v527 = vmul.f32 %v509, 0.1
  %v528 = vmul.f32 %v511, 0.1
  %v529 = vmax.f32 %v475, %v513
  %v530 = vmax.f32 %v477, %v514
  %v531 = vmax.f32 %v479, %v515
  %v532 = vmax.f32 %v481, %v516
  %v533 = vmax.f32 %v485, %v517
  %v534 = vmax.f32 %v487, %v518
  %v535 = vmax.f32 %v489, %v519
  %v536 = vmax.f32 %v491, %v520
  %v537 = vmax.f32 %v495, %v521
  %v538 = vmax.f32 %v497, %v522
  %v539 = vmax.f32 %v499, %v523
  %v540 = vmax.f32 %v501, %v524
  %v541 = vmax.f32 %v505, %v525
  %v542 = vmax.f32 %v507, %v526
  %v543 = vmax.f32 %v509, %v527
  %v544 = vmax.f32 %v511, %v528
  %v545 = vpack.c.bf16 %v531, %v529
  %v546 = vpack.c.bf16 %v532, %v530
  %v547 = vpack.c.bf16 %v535, %v533
  %v548 = vpack.c.bf16 %v536, %v534
  %v549 = vpack.c.bf16 %v539, %v537
  %v550 = vpack.c.bf16 %v540, %v538
  %v551 = vpack.c.bf16 %v543, %v541
  %v552 = vpack.c.bf16 %v544, %v542
  %v553 = vld [vmem:[%s2] sm:$0xff]
  %v554 = vld [vmem:[%s2 + $0x8] sm:$0xff]
  %v555 = vld [vmem:[%s2 + $0x10] sm:$0xff]
  %v556 = vld [vmem:[%s2 + $0x18] sm:$0xff]
  %v557 = vld [vmem:[%s2 + $0x20] sm:$0xff]
  %v558 = vld [vmem:[%s2 + $0x28] sm:$0xff]
  %v559 = vld [vmem:[%s2 + $0x30] sm:$0xff]
  %v560 = vld [vmem:[%s2 + $0x38] sm:$0xff]
  %v561 = vld [vmem:[%s2 + $0x40] sm:$0xff]
  %v562 = vld [vmem:[%s2 + $0x48] sm:$0xff]
  %v563 = vld [vmem:[%s2 + $0x50] sm:$0xff]
  %v564 = vld [vmem:[%s2 + $0x58] sm:$0xff]
  %v565 = vld [vmem:[%s2 + $0x60] sm:$0xff]
  %v566 = vld [vmem:[%s2 + $0x68] sm:$0xff]
  %v567 = vld [vmem:[%s2 + $0x70] sm:$0xff]
  %v568 = vld [vmem:[%s2 + $0x78] sm:$0xff]
  %v569 = vld [vmem:[%s2 + $0x80] sm:$0xff]
  %v570 = vld [vmem:[%s2 + $0x88] sm:$0xff]
  %v571 = vld [vmem:[%s2 + $0x90] sm:$0xff]
  %v572 = vld [vmem:[%s2 + $0x98] sm:$0xff]
  %v573 = vld [vmem:[%s2 + $0xa0] sm:$0xff]
  %v574 = vld [vmem:[%s2 + $0xa8] sm:$0xff]
  %v575 = vld [vmem:[%s2 + $0xb0] sm:$0xff]
  %v576 = vld [vmem:[%s2 + $0xb8] sm:$0xff]
  %v577 = vld [vmem:[%s2 + $0xc0] sm:$0xff]
  %v578 = vld [vmem:[%s2 + $0xc8] sm:$0xff]
  %v579 = vld [vmem:[%s2 + $0xd0] sm:$0xff]
  %v580 = vld [vmem:[%s2 + $0xd8] sm:$0xff]
  %v581 = vld [vmem:[%s2 + $0xe0] sm:$0xff]
  %v582 = vld [vmem:[%s2 + $0xe8] sm:$0xff]
  %v583 = vld [vmem:[%s2 + $0xf0] sm:$0xff]
  %v584 = vld [vmem:[%s2 + $0xf8] sm:$0xff]
  %s585 = scalar_lea.vmem %s6, 1
  %v586 = vld [vmem:[%s585] ss:$8 sm:$0x3]
  %v588 = vlaneseq
  %v589 = vshrl.u32 %v588, 7
  %v590 = vsub.s32 0, %v589
  %v591 = vrot.slane %v586, %v590
  %v592 = vlaneseq
  %v593 = vshrl.u32 %v592, 7
  %v594 = vsub.s32 1, %v593
  %v595 = vrot.slane %v586, %v594
  %v630 = vunpack.c.l.b16 %v553
  %v631 = vunpack.c.h.b16 %v553
  %v632 = vunpack.c.l.b16 %v554
  %v633 = vunpack.c.h.b16 %v554
  %v634 = vunpack.c.l.b16 %v555
  %v635 = vunpack.c.h.b16 %v555
  %v636 = vunpack.c.l.b16 %v556
  %v637 = vunpack.c.h.b16 %v556
  %v638 = vunpack.c.l.b16 %v557
  %v639 = vunpack.c.h.b16 %v557
  %v640 = vunpack.c.l.b16 %v558
  %v641 = vunpack.c.h.b16 %v558
  %v642 = vunpack.c.l.b16 %v559
  %v643 = vunpack.c.h.b16 %v559
  %v644 = vunpack.c.l.b16 %v560
  %v645 = vunpack.c.h.b16 %v560
  %v646 = vunpack.c.l.b16 %v561
  %v647 = vunpack.c.h.b16 %v561
  %v648 = vunpack.c.l.b16 %v562
  %v649 = vunpack.c.h.b16 %v562
  %v650 = vunpack.c.l.b16 %v563
  %v651 = vunpack.c.h.b16 %v563
  %v652 = vunpack.c.l.b16 %v564
  %v653 = vunpack.c.h.b16 %v564
  %v654 = vunpack.c.l.b16 %v565
  %v655 = vunpack.c.h.b16 %v565
  %v656 = vunpack.c.l.b16 %v566
  %v657 = vunpack.c.h.b16 %v566
  %v658 = vunpack.c.l.b16 %v567
  %v659 = vunpack.c.h.b16 %v567
  %v660 = vunpack.c.l.b16 %v568
  %v661 = vunpack.c.h.b16 %v568
  %v662 = vunpack.c.l.b16 %v569
  %v663 = vunpack.c.h.b16 %v569
  %v664 = vunpack.c.l.b16 %v570
  %v665 = vunpack.c.h.b16 %v570
  %v666 = vunpack.c.l.b16 %v571
  %v667 = vunpack.c.h.b16 %v571
  %v668 = vunpack.c.l.b16 %v572
  %v669 = vunpack.c.h.b16 %v572
  %v670 = vunpack.c.l.b16 %v573
  %v671 = vunpack.c.h.b16 %v573
  %v672 = vunpack.c.l.b16 %v574
  %v673 = vunpack.c.h.b16 %v574
  %v674 = vunpack.c.l.b16 %v575
  %v675 = vunpack.c.h.b16 %v575
  %v676 = vunpack.c.l.b16 %v576
  %v677 = vunpack.c.h.b16 %v576
  %v678 = vunpack.c.l.b16 %v577
  %v679 = vunpack.c.h.b16 %v577
  %v680 = vunpack.c.l.b16 %v578
  %v681 = vunpack.c.h.b16 %v578
  %v682 = vunpack.c.l.b16 %v579
  %v683 = vunpack.c.h.b16 %v579
  %v684 = vunpack.c.l.b16 %v580
  %v685 = vunpack.c.h.b16 %v580
  %v686 = vunpack.c.l.b16 %v581
  %v687 = vunpack.c.h.b16 %v581
  %v688 = vunpack.c.l.b16 %v582
  %v689 = vunpack.c.h.b16 %v582
  %v690 = vunpack.c.l.b16 %v583
  %v691 = vunpack.c.h.b16 %v583
  %v692 = vunpack.c.l.b16 %v584
  %v693 = vunpack.c.h.b16 %v584
  %v694 = vpack.c.b16 %v632, %v630
  %v695 = vpack.c.b16 %v633, %v631
  %v696 = vpack.c.b16 %v636, %v634
  %v697 = vpack.c.b16 %v637, %v635
  %v698 = vpack.c.b16 %v640, %v638
  %v699 = vpack.c.b16 %v641, %v639
  %v700 = vpack.c.b16 %v644, %v642
  %v701 = vpack.c.b16 %v645, %v643
  %v702 = vpack.c.b16 %v648, %v646
  %v703 = vpack.c.b16 %v649, %v647
  %v704 = vpack.c.b16 %v652, %v650
  %v705 = vpack.c.b16 %v653, %v651
  %v706 = vpack.c.b16 %v656, %v654
  %v707 = vpack.c.b16 %v657, %v655
  %v708 = vpack.c.b16 %v660, %v658
  %v709 = vpack.c.b16 %v661, %v659
  %v710 = vpack.c.b16 %v664, %v662
  %v711 = vpack.c.b16 %v665, %v663
  %v712 = vpack.c.b16 %v668, %v666
  %v713 = vpack.c.b16 %v669, %v667
  %v714 = vpack.c.b16 %v672, %v670
  %v715 = vpack.c.b16 %v673, %v671
  %v716 = vpack.c.b16 %v676, %v674
  %v717 = vpack.c.b16 %v677, %v675
  %v718 = vpack.c.b16 %v680, %v678
  %v719 = vpack.c.b16 %v681, %v679
  %v720 = vpack.c.b16 %v684, %v682
  %v721 = vpack.c.b16 %v685, %v683
  %v722 = vpack.c.b16 %v688, %v686
  %v723 = vpack.c.b16 %v689, %v687
  %v724 = vpack.c.b16 %v692, %v690
  %v725 = vpack.c.b16 %v693, %v691
  %758 = vmatprep.subr.bf16.mxu0 %v695
  %759 = vmatpush1.bf16.msra.mxu0 %v694
  %760 = vmatprep.subr.bf16.mxu0 %v697
  %761 = vmatpush1.bf16.msra.mxu0 %v696
  %762 = vmatprep.subr.bf16.mxu0 %v699
  %763 = vmatpush1.bf16.msra.mxu0 %v698
  %764 = vmatprep.subr.bf16.mxu0 %v701
  %765 = vmatpush1.bf16.msra.mxu0 %v700
  %766 = vmatprep.subr.bf16.mxu0 %v703
  %767 = vmatpush1.bf16.msra.mxu0 %v702
  %768 = vmatprep.subr.bf16.mxu0 %v705
  %769 = vmatpush1.bf16.msra.mxu0 %v704
  %770 = vmatprep.subr.bf16.mxu0 %v707
  %771 = vmatpush1.bf16.msra.mxu0 %v706
  %772 = vmatprep.subr.bf16.mxu0 %v709
  %773 = vmatpush1.bf16.msra.mxu0 %v708
  %774 = vmatprep.subr.bf16.mxu0 %v711
  %775 = vmatpush1.bf16.msra.mxu0 %v710
  %776 = vmatprep.subr.bf16.mxu0 %v713
  %777 = vmatpush1.bf16.msra.mxu0 %v712
  %778 = vmatprep.subr.bf16.mxu0 %v715
  %779 = vmatpush1.bf16.msra.mxu0 %v714
  %780 = vmatprep.subr.bf16.mxu0 %v717
  %781 = vmatpush1.bf16.msra.mxu0 %v716
  %782 = vmatprep.subr.bf16.mxu0 %v719
  %783 = vmatpush1.bf16.msra.mxu0 %v718
  %784 = vmatprep.subr.bf16.mxu0 %v721
  %785 = vmatpush1.bf16.msra.mxu0 %v720
  %786 = vmatprep.subr.bf16.mxu0 %v723
  %787 = vmatpush1.bf16.msra.mxu0 %v722
  %788 = vmatprep.subr.bf16.mxu0 %v725
  %789 = vmatpush1.bf16.msra.mxu0 %v724
  %790 = vmatprep.mubr.bf16.mxu0 %v393
  %791 = vmatmul.mubr.bf16.gmra.mrb[0].mxu0 %v392
  %v792 = vpop.f32.mrb[0].mxu0
  %v793 = vadd.f32 %v591, %v792
  %v794 = vpop.f32.mrb[0].mxu0
  %v795 = vadd.f32 %v595, %v794
  %v796 = vpop.f32.mrb[0].mxu0
  %v797 = vadd.f32 %v591, %v796
  %v798 = vpop.f32.mrb[0].mxu0
  %v799 = vadd.f32 %v595, %v798
  %800 = vmatprep.mubr.bf16.mxu0 %v395
  %801 = vmatmul.mubr.bf16.gmra.mrb[0].mxu0 %v394
  %v802 = vpop.f32.mrb[0].mxu0
  %v803 = vadd.f32 %v591, %v802
  %v804 = vpop.f32.mrb[0].mxu0
  %v805 = vadd.f32 %v595, %v804
  %v806 = vpop.f32.mrb[0].mxu0
  %v807 = vadd.f32 %v591, %v806
  %v808 = vpop.f32.mrb[0].mxu0
  %v809 = vadd.f32 %v595, %v808
  %810 = vmatprep.mubr.bf16.mxu0 %v397
  %811 = vmatmul.mubr.bf16.gmra.mrb[0].mxu0 %v396
  %v812 = vpop.f32.mrb[0].mxu0
  %v813 = vadd.f32 %v591, %v812
  %v814 = vpop.f32.mrb[0].mxu0
  %v815 = vadd.f32 %v595, %v814
  %v816 = vpop.f32.mrb[0].mxu0
  %v817 = vadd.f32 %v591, %v816
  %v818 = vpop.f32.mrb[0].mxu0
  %v819 = vadd.f32 %v595, %v818
  %820 = vmatprep.mubr.bf16.mxu0 %v399
  %821 = vmatmul.mubr.bf16.gmra.mrb[0].mxu0 %v398
  %v822 = vpop.f32.mrb[0].mxu0
  %v823 = vadd.f32 %v591, %v822
  %v824 = vpop.f32.mrb[0].mxu0
  %v825 = vadd.f32 %v595, %v824
  %v826 = vpop.f32.mrb[0].mxu0
  %v827 = vadd.f32 %v591, %v826
  %v828 = vpop.f32.mrb[0].mxu0
  %v829 = vadd.f32 %v595, %v828
  %830 = vdwg.mxu0
  %v831 = vmul.f32 %v793, 0.1
  %v832 = vmul.f32 %v795, 0.1
  %v833 = vmul.f32 %v797, 0.1
  %v834 = vmul.f32 %v799, 0.1
  %v835 = vmul.f32 %v803, 0.1
  %v836 = vmul.f32 %v805, 0.1
  %v837 = vmul.f32 %v807, 0.1
  %v838 = vmul.f32 %v809, 0.1
  %v839 = vmul.f32 %v813, 0.1
  %v840 = vmul.f32 %v815, 0.1
  %v841 = vmul.f32 %v817, 0.1
  %v842 = vmul.f32 %v819, 0.1
  %v843 = vmul.f32 %v823, 0.1
  %v844 = vmul.f32 %v825, 0.1
  %v845 = vmul.f32 %v827, 0.1
  %v846 = vmul.f32 %v829, 0.1
  %v847 = vmax.f32 %v793, %v831
  %v848 = vmax.f32 %v795, %v832
  %v849 = vmax.f32 %v797, %v833
  %v850 = vmax.f32 %v799, %v834
  %v851 = vmax.f32 %v803, %v835
  %v852 = vmax.f32 %v805, %v836
  %v853 = vmax.f32 %v807, %v837
  %v854 = vmax.f32 %v809, %v838
  %v855 = vmax.f32 %v813, %v839
  %v856 = vmax.f32 %v815, %v840
  %v857 = vmax.f32 %v817, %v841
  %v858 = vmax.f32 %v819, %v842
  %v859 = vmax.f32 %v823, %v843
  %v860 = vmax.f32 %v825, %v844
  %v861 = vmax.f32 %v827, %v845
  %v862 = vmax.f32 %v829, %v846
  %v863 = vpack.c.bf16 %v849, %v847
  %v864 = vpack.c.bf16 %v850, %v848
  %v865 = vpack.c.bf16 %v853, %v851
  %v866 = vpack.c.bf16 %v854, %v852
  %v867 = vpack.c.bf16 %v857, %v855
  %v868 = vpack.c.bf16 %v858, %v856
  %v869 = vpack.c.bf16 %v861, %v859
  %v870 = vpack.c.bf16 %v862, %v860
  %871 = vmatprep.subr.bf16.mxu0 %v695
  %872 = vmatpush1.bf16.msra.mxu0 %v694
  %873 = vmatprep.subr.bf16.mxu0 %v697
  %874 = vmatpush1.bf16.msra.mxu0 %v696
  %875 = vmatprep.subr.bf16.mxu0 %v699
  %876 = vmatpush1.bf16.msra.mxu0 %v698
  %877 = vmatprep.subr.bf16.mxu0 %v701
  %878 = vmatpush1.bf16.msra.mxu0 %v700
  %879 = vmatprep.subr.bf16.mxu0 %v703
  %880 = vmatpush1.bf16.msra.mxu0 %v702
  %881 = vmatprep.subr.bf16.mxu0 %v705
  %882 = vmatpush1.bf16.msra.mxu0 %v704
  %883 = vmatprep.subr.bf16.mxu0 %v707
  %884 = vmatpush1.bf16.msra.mxu0 %v706
  %885 = vmatprep.subr.bf16.mxu0 %v709
  %886 = vmatpush1.bf16.msra.mxu0 %v708
  %887 = vmatprep.subr.bf16.mxu0 %v711
  %888 = vmatpush1.bf16.msra.mxu0 %v710
  %889 = vmatprep.subr.bf16.mxu0 %v713
  %890 = vmatpush1.bf16.msra.mxu0 %v712
  %891 = vmatprep.subr.bf16.mxu0 %v715
  %892 = vmatpush1.bf16.msra.mxu0 %v714
  %893 = vmatprep.subr.bf16.mxu0 %v717
  %894 = vmatpush1.bf16.msra.mxu0 %v716
  %895 = vmatprep.subr.bf16.mxu0 %v719
  %896 = vmatpush1.bf16.msra.mxu0 %v718
  %897 = vmatprep.subr.bf16.mxu0 %v721
  %898 = vmatpush1.bf16.msra.mxu0 %v720
  %899 = vmatprep.subr.bf16.mxu0 %v723
  %900 = vmatpush1.bf16.msra.mxu0 %v722
  %901 = vmatprep.subr.bf16.mxu0 %v725
  %902 = vmatpush1.bf16.msra.mxu0 %v724
  %903 = vmatprep.mubr.bf16.mxu0 %v546
  %904 = vmatmul.mubr.bf16.gmra.mrb[0].mxu0 %v545
  %v905 = vpop.f32.mrb[0].mxu0
  %v906 = vadd.f32 %v591, %v905
  %v907 = vpop.f32.mrb[0].mxu0
  %v908 = vadd.f32 %v595, %v907
  %v909 = vpop.f32.mrb[0].mxu0
  %v910 = vadd.f32 %v591, %v909
  %v911 = vpop.f32.mrb[0].mxu0
  %v912 = vadd.f32 %v595, %v911
  %913 = vmatprep.mubr.bf16.mxu0 %v548
  %914 = vmatmul.mubr.bf16.gmra.mrb[0].mxu0 %v547
  %v915 = vpop.f32.mrb[0].mxu0
  %v916 = vadd.f32 %v591, %v915
  %v917 = vpop.f32.mrb[0].mxu0
  %v918 = vadd.f32 %v595, %v917
  %v919 = vpop.f32.mrb[0].mxu0
  %v920 = vadd.f32 %v591, %v919
  %v921 = vpop.f32.mrb[0].mxu0
  %v922 = vadd.f32 %v595, %v921
  %923 = vmatprep.mubr.bf16.mxu0 %v550
  %924 = vmatmul.mubr.bf16.gmra.mrb[0].mxu0 %v549
  %v925 = vpop.f32.mrb[0].mxu0
  %v926 = vadd.f32 %v591, %v925
  %v927 = vpop.f32.mrb[0].mxu0
  %v928 = vadd.f32 %v595, %v927
  %v929 = vpop.f32.mrb[0].mxu0
  %v930 = vadd.f32 %v591, %v929
  %v931 = vpop.f32.mrb[0].mxu0
  %v932 = vadd.f32 %v595, %v931
  %933 = vmatprep.mubr.bf16.mxu0 %v552
  %934 = vmatmul.mubr.bf16.gmra.mrb[0].mxu0 %v551
  %v935 = vpop.f32.mrb[0].mxu0
  %v936 = vadd.f32 %v591, %v935
  %v937 = vpop.f32.mrb[0].mxu0
  %v938 = vadd.f32 %v595, %v937
  %v939 = vpop.f32.mrb[0].mxu0
  %v940 = vadd.f32 %v591, %v939
  %v941 = vpop.f32.mrb[0].mxu0
  %v942 = vadd.f32 %v595, %v941
  %943 = vdwg.mxu0
  %v944 = vmul.f32 %v906, 0.1
  %v945 = vmul.f32 %v908, 0.1
  %v946 = vmul.f32 %v910, 0.1
  %v947 = vmul.f32 %v912, 0.1
  %v948 = vmul.f32 %v916, 0.1
  %v949 = vmul.f32 %v918, 0.1
  %v950 = vmul.f32 %v920, 0.1
  %v951 = vmul.f32 %v922, 0.1
  %v952 = vmul.f32 %v926, 0.1
  %v953 = vmul.f32 %v928, 0.1
  %v954 = vmul.f32 %v930, 0.1
  %v955 = vmul.f32 %v932, 0.1
  %v956 = vmul.f32 %v936, 0.1
  %v957 = vmul.f32 %v938, 0.1
  %v958 = vmul.f32 %v940, 0.1
  %v959 = vmul.f32 %v942, 0.1
  %v960 = vmax.f32 %v906, %v944
  %v961 = vmax.f32 %v908, %v945
  %v962 = vmax.f32 %v910, %v946
  %v963 = vmax.f32 %v912, %v947
  %v964 = vmax.f32 %v916, %v948
  %v965 = vmax.f32 %v918, %v949
  %v966 = vmax.f32 %v920, %v950
  %v967 = vmax.f32 %v922, %v951
  %v968 = vmax.f32 %v926, %v952
  %v969 = vmax.f32 %v928, %v953
  %v970 = vmax.f32 %v930, %v954
  %v971 = vmax.f32 %v932, %v955
  %v972 = vmax.f32 %v936, %v956
  %v973 = vmax.f32 %v938, %v957
  %v974 = vmax.f32 %v940, %v958
  %v975 = vmax.f32 %v942, %v959
  %v976 = vpack.c.bf16 %v962, %v960
  %v977 = vpack.c.bf16 %v963, %v961
  %v978 = vpack.c.bf16 %v966, %v964
  %v979 = vpack.c.bf16 %v967, %v965
  %v980 = vpack.c.bf16 %v970, %v968
  %v981 = vpack.c.bf16 %v971, %v969
  %v982 = vpack.c.bf16 %v974, %v972
  %v983 = vpack.c.bf16 %v975, %v973
  %v984 = vld [vmem:[%s3] sm:$0xff]
  %v985 = vld [vmem:[%s3 + $0x8] sm:$0xff]
  %v986 = vld [vmem:[%s3 + $0x10] sm:$0xff]
  %v987 = vld [vmem:[%s3 + $0x18] sm:$0xff]
  %v988 = vld [vmem:[%s3 + $0x20] sm:$0xff]
  %v989 = vld [vmem:[%s3 + $0x28] sm:$0xff]
  %v990 = vld [vmem:[%s3 + $0x30] sm:$0xff]
  %v991 = vld [vmem:[%s3 + $0x38] sm:$0xff]
  %v992 = vld [vmem:[%s3 + $0x40] sm:$0xff]
  %v993 = vld [vmem:[%s3 + $0x48] sm:$0xff]
  %v994 = vld [vmem:[%s3 + $0x50] sm:$0xff]
  %v995 = vld [vmem:[%s3 + $0x58] sm:$0xff]
  %v996 = vld [vmem:[%s3 + $0x60] sm:$0xff]
  %v997 = vld [vmem:[%s3 + $0x68] sm:$0xff]
  %v998 = vld [vmem:[%s3 + $0x70] sm:$0xff]
  %v999 = vld [vmem:[%s3 + $0x78] sm:$0xff]
  %v1000 = vld [vmem:[%s3 + $0x80] sm:$0xff]
  %v1001 = vld [vmem:[%s3 + $0x88] sm:$0xff]
  %v1002 = vld [vmem:[%s3 + $0x90] sm:$0xff]
  %v1003 = vld [vmem:[%s3 + $0x98] sm:$0xff]
  %v1004 = vld [vmem:[%s3 + $0xa0] sm:$0xff]
  %v1005 = vld [vmem:[%s3 + $0xa8] sm:$0xff]
  %v1006 = vld [vmem:[%s3 + $0xb0] sm:$0xff]
  %v1007 = vld [vmem:[%s3 + $0xb8] sm:$0xff]
  %v1008 = vld [vmem:[%s3 + $0xc0] sm:$0xff]
  %v1009 = vld [vmem:[%s3 + $0xc8] sm:$0xff]
  %v1010 = vld [vmem:[%s3 + $0xd0] sm:$0xff]
  %v1011 = vld [vmem:[%s3 + $0xd8] sm:$0xff]
  %v1012 = vld [vmem:[%s3 + $0xe0] sm:$0xff]
  %v1013 = vld [vmem:[%s3 + $0xe8] sm:$0xff]
  %v1014 = vld [vmem:[%s3 + $0xf0] sm:$0xff]
  %v1015 = vld [vmem:[%s3 + $0xf8] sm:$0xff]
  %s1016 = scalar_lea.vmem %s6, 2
  %v1017 = vld [vmem:[%s1016] ss:$8 sm:$0x3]
  %v1019 = vlaneseq
  %v1020 = vshrl.u32 %v1019, 7
  %v1021 = vsub.s32 0, %v1020
  %v1022 = vrot.slane %v1017, %v1021
  %v1023 = vlaneseq
  %v1024 = vshrl.u32 %v1023, 7
  %v1025 = vsub.s32 1, %v1024
  %v1026 = vrot.slane %v1017, %v1025
  %v1061 = vunpack.c.l.b16 %v984
  %v1062 = vunpack.c.h.b16 %v984
  %v1063 = vunpack.c.l.b16 %v985
  %v1064 = vunpack.c.h.b16 %v985
  %v1065 = vunpack.c.l.b16 %v986
  %v1066 = vunpack.c.h.b16 %v986
  %v1067 = vunpack.c.l.b16 %v987
  %v1068 = vunpack.c.h.b16 %v987
  %v1069 = vunpack.c.l.b16 %v988
  %v1070 = vunpack.c.h.b16 %v988
  %v1071 = vunpack.c.l.b16 %v989
  %v1072 = vunpack.c.h.b16 %v989
  %v1073 = vunpack.c.l.b16 %v990
  %v1074 = vunpack.c.h.b16 %v990
  %v1075 = vunpack.c.l.b16 %v991
  %v1076 = vunpack.c.h.b16 %v991
  %v1077 = vunpack.c.l.b16 %v992
  %v1078 = vunpack.c.h.b16 %v992
  %v1079 = vunpack.c.l.b16 %v993
  %v1080 = vunpack.c.h.b16 %v993
  %v1081 = vunpack.c.l.b16 %v994
  %v1082 = vunpack.c.h.b16 %v994
  %v1083 = vunpack.c.l.b16 %v995
  %v1084 = vunpack.c.h.b16 %v995
  %v1085 = vunpack.c.l.b16 %v996
  %v1086 = vunpack.c.h.b16 %v996
  %v1087 = vunpack.c.l.b16 %v997
  %v1088 = vunpack.c.h.b16 %v997
  %v1089 = vunpack.c.l.b16 %v998
  %v1090 = vunpack.c.h.b16 %v998
  %v1091 = vunpack.c.l.b16 %v999
  %v1092 = vunpack.c.h.b16 %v999
  %v1093 = vunpack.c.l.b16 %v1000
  %v1094 = vunpack.c.h.b16 %v1000
  %v1095 = vunpack.c.l.b16 %v1001
  %v1096 = vunpack.c.h.b16 %v1001
  %v1097 = vunpack.c.l.b16 %v1002
  %v1098 = vunpack.c.h.b16 %v1002
  %v1099 = vunpack.c.l.b16 %v1003
  %v1100 = vunpack.c.h.b16 %v1003
  %v1101 = vunpack.c.l.b16 %v1004
  %v1102 = vunpack.c.h.b16 %v1004
  %v1103 = vunpack.c.l.b16 %v1005
  %v1104 = vunpack.c.h.b16 %v1005
  %v1105 = vunpack.c.l.b16 %v1006
  %v1106 = vunpack.c.h.b16 %v1006
  %v1107 = vunpack.c.l.b16 %v1007
  %v1108 = vunpack.c.h.b16 %v1007
  %v1109 = vunpack.c.l.b16 %v1008
  %v1110 = vunpack.c.h.b16 %v1008
  %v1111 = vunpack.c.l.b16 %v1009
  %v1112 = vunpack.c.h.b16 %v1009
  %v1113 = vunpack.c.l.b16 %v1010
  %v1114 = vunpack.c.h.b16 %v1010
  %v1115 = vunpack.c.l.b16 %v1011
  %v1116 = vunpack.c.h.b16 %v1011
  %v1117 = vunpack.c.l.b16 %v1012
  %v1118 = vunpack.c.h.b16 %v1012
  %v1119 = vunpack.c.l.b16 %v1013
  %v1120 = vunpack.c.h.b16 %v1013
  %v1121 = vunpack.c.l.b16 %v1014
  %v1122 = vunpack.c.h.b16 %v1014
  %v1123 = vunpack.c.l.b16 %v1015
  %v1124 = vunpack.c.h.b16 %v1015
  %v1125 = vpack.c.b16 %v1063, %v1061
  %v1126 = vpack.c.b16 %v1064, %v1062
  %v1127 = vpack.c.b16 %v1067, %v1065
  %v1128 = vpack.c.b16 %v1068, %v1066
  %v1129 = vpack.c.b16 %v1071, %v1069
  %v1130 = vpack.c.b16 %v1072, %v1070
  %v1131 = vpack.c.b16 %v1075, %v1073
  %v1132 = vpack.c.b16 %v1076, %v1074
  %v1133 = vpack.c.b16 %v1079, %v1077
  %v1134 = vpack.c.b16 %v1080, %v1078
  %v1135 = vpack.c.b16 %v1083, %v1081
  %v1136 = vpack.c.b16 %v1084, %v1082
  %v1137 = vpack.c.b16 %v1087, %v1085
  %v1138 = vpack.c.b16 %v1088, %v1086
  %v1139 = vpack.c.b16 %v1091, %v1089
  %v1140 = vpack.c.b16 %v1092, %v1090
  %v1141 = vpack.c.b16 %v1095, %v1093
  %v1142 = vpack.c.b16 %v1096, %v1094
  %v1143 = vpack.c.b16 %v1099, %v1097
  %v1144 = vpack.c.b16 %v1100, %v1098
  %v1145 = vpack.c.b16 %v1103, %v1101
  %v1146 = vpack.c.b16 %v1104, %v1102
  %v1147 = vpack.c.b16 %v1107, %v1105
  %v1148 = vpack.c.b16 %v1108, %v1106
  %v1149 = vpack.c.b16 %v1111, %v1109
  %v1150 = vpack.c.b16 %v1112, %v1110
  %v1151 = vpack.c.b16 %v1115, %v1113
  %v1152 = vpack.c.b16 %v1116, %v1114
  %v1153 = vpack.c.b16 %v1119, %v1117
  %v1154 = vpack.c.b16 %v1120, %v1118
  %v1155 = vpack.c.b16 %v1123, %v1121
  %v1156 = vpack.c.b16 %v1124, %v1122
  %1189 = vmatprep.subr.bf16.mxu0 %v1126
  %1190 = vmatpush1.bf16.msra.mxu0 %v1125
  %1191 = vmatprep.subr.bf16.mxu0 %v1128
  %1192 = vmatpush1.bf16.msra.mxu0 %v1127
  %1193 = vmatprep.subr.bf16.mxu0 %v1130
  %1194 = vmatpush1.bf16.msra.mxu0 %v1129
  %1195 = vmatprep.subr.bf16.mxu0 %v1132
  %1196 = vmatpush1.bf16.msra.mxu0 %v1131
  %1197 = vmatprep.subr.bf16.mxu0 %v1134
  %1198 = vmatpush1.bf16.msra.mxu0 %v1133
  %1199 = vmatprep.subr.bf16.mxu0 %v1136
  %1200 = vmatpush1.bf16.msra.mxu0 %v1135
  %1201 = vmatprep.subr.bf16.mxu0 %v1138
  %1202 = vmatpush1.bf16.msra.mxu0 %v1137
  %1203 = vmatprep.subr.bf16.mxu0 %v1140
  %1204 = vmatpush1.bf16.msra.mxu0 %v1139
  %1205 = vmatprep.subr.bf16.mxu0 %v1142
  %1206 = vmatpush1.bf16.msra.mxu0 %v1141
  %1207 = vmatprep.subr.bf16.mxu0 %v1144
  %1208 = vmatpush1.bf16.msra.mxu0 %v1143
  %1209 = vmatprep.subr.bf16.mxu0 %v1146
  %1210 = vmatpush1.bf16.msra.mxu0 %v1145
  %1211 = vmatprep.subr.bf16.mxu0 %v1148
  %1212 = vmatpush1.bf16.msra.mxu0 %v1147
  %1213 = vmatprep.subr.bf16.mxu0 %v1150
  %1214 = vmatpush1.bf16.msra.mxu0 %v1149
  %1215 = vmatprep.subr.bf16.mxu0 %v1152
  %1216 = vmatpush1.bf16.msra.mxu0 %v1151
  %1217 = vmatprep.subr.bf16.mxu0 %v1154
  %1218 = vmatpush1.bf16.msra.mxu0 %v1153
  %1219 = vmatprep.subr.bf16.mxu0 %v1156
  %1220 = vmatpush1.bf16.msra.mxu0 %v1155
  %1221 = vmatprep.mubr.bf16.mxu0 %v864
  %1222 = vmatmul.mubr.bf16.gmra.mrb[0].mxu0 %v863
  %v1223 = vpop.f32.mrb[0].mxu0
  %v1224 = vadd.f32 %v1022, %v1223
  %v1225 = vpop.f32.mrb[0].mxu0
  %v1226 = vadd.f32 %v1026, %v1225
  %v1227 = vpop.f32.mrb[0].mxu0
  %v1228 = vadd.f32 %v1022, %v1227
  %v1229 = vpop.f32.mrb[0].mxu0
  %v1230 = vadd.f32 %v1026, %v1229
  %1231 = vmatprep.mubr.bf16.mxu0 %v866
  %1232 = vmatmul.mubr.bf16.gmra.mrb[0].mxu0 %v865
  %v1233 = vpop.f32.mrb[0].mxu0
  %v1234 = vadd.f32 %v1022, %v1233
  %v1235 = vpop.f32.mrb[0].mxu0
  %v1236 = vadd.f32 %v1026, %v1235
  %v1237 = vpop.f32.mrb[0].mxu0
  %v1238 = vadd.f32 %v1022, %v1237
  %v1239 = vpop.f32.mrb[0].mxu0
  %v1240 = vadd.f32 %v1026, %v1239
  %1241 = vmatprep.mubr.bf16.mxu0 %v868
  %1242 = vmatmul.mubr.bf16.gmra.mrb[0].mxu0 %v867
  %v1243 = vpop.f32.mrb[0].mxu0
  %v1244 = vadd.f32 %v1022, %v1243
  %v1245 = vpop.f32.mrb[0].mxu0
  %v1246 = vadd.f32 %v1026, %v1245
  %v1247 = vpop.f32.mrb[0].mxu0
  %v1248 = vadd.f32 %v1022, %v1247
  %v1249 = vpop.f32.mrb[0].mxu0
  %v1250 = vadd.f32 %v1026, %v1249
  %1251 = vmatprep.mubr.bf16.mxu0 %v870
  %1252 = vmatmul.mubr.bf16.gmra.mrb[0].mxu0 %v869
  %v1253 = vpop.f32.mrb[0].mxu0
  %v1254 = vadd.f32 %v1022, %v1253
  %v1255 = vpop.f32.mrb[0].mxu0
  %v1256 = vadd.f32 %v1026, %v1255
  %v1257 = vpop.f32.mrb[0].mxu0
  %v1258 = vadd.f32 %v1022, %v1257
  %v1259 = vpop.f32.mrb[0].mxu0
  %v1260 = vadd.f32 %v1026, %v1259
  %1261 = vdwg.mxu0
  %v1262 = vmul.f32 %v1224, 0.1
  %v1263 = vmul.f32 %v1226, 0.1
  %v1264 = vmul.f32 %v1228, 0.1
  %v1265 = vmul.f32 %v1230, 0.1
  %v1266 = vmul.f32 %v1234, 0.1
  %v1267 = vmul.f32 %v1236, 0.1
  %v1268 = vmul.f32 %v1238, 0.1
  %v1269 = vmul.f32 %v1240, 0.1
  %v1270 = vmul.f32 %v1244, 0.1
  %v1271 = vmul.f32 %v1246, 0.1
  %v1272 = vmul.f32 %v1248, 0.1
  %v1273 = vmul.f32 %v1250, 0.1
  %v1274 = vmul.f32 %v1254, 0.1
  %v1275 = vmul.f32 %v1256, 0.1
  %v1276 = vmul.f32 %v1258, 0.1
  %v1277 = vmul.f32 %v1260, 0.1
  %v1278 = vmax.f32 %v1224, %v1262
  %v1279 = vmax.f32 %v1226, %v1263
  %v1280 = vmax.f32 %v1228, %v1264
  %v1281 = vmax.f32 %v1230, %v1265
  %v1282 = vmax.f32 %v1234, %v1266
  %v1283 = vmax.f32 %v1236, %v1267
  %v1284 = vmax.f32 %v1238, %v1268
  %v1285 = vmax.f32 %v1240, %v1269
  %v1286 = vmax.f32 %v1244, %v1270
  %v1287 = vmax.f32 %v1246, %v1271
  %v1288 = vmax.f32 %v1248, %v1272
  %v1289 = vmax.f32 %v1250, %v1273
  %v1290 = vmax.f32 %v1254, %v1274
  %v1291 = vmax.f32 %v1256, %v1275
  %v1292 = vmax.f32 %v1258, %v1276
  %v1293 = vmax.f32 %v1260, %v1277
  %v1294 = vpack.c.bf16 %v1280, %v1278
  %v1295 = vpack.c.bf16 %v1281, %v1279
  %v1296 = vpack.c.bf16 %v1284, %v1282
  %v1297 = vpack.c.bf16 %v1285, %v1283
  %v1298 = vpack.c.bf16 %v1288, %v1286
  %v1299 = vpack.c.bf16 %v1289, %v1287
  %v1300 = vpack.c.bf16 %v1292, %v1290
  %v1301 = vpack.c.bf16 %v1293, %v1291
  %1302 = vmatprep.subr.bf16.mxu0 %v1126
  %1303 = vmatpush1.bf16.msra.mxu0 %v1125
  %1304 = vmatprep.subr.bf16.mxu0 %v1128
  %1305 = vmatpush1.bf16.msra.mxu0 %v1127
  %1306 = vmatprep.subr.bf16.mxu0 %v1130
  %1307 = vmatpush1.bf16.msra.mxu0 %v1129
  %1308 = vmatprep.subr.bf16.mxu0 %v1132
  %1309 = vmatpush1.bf16.msra.mxu0 %v1131
  %1310 = vmatprep.subr.bf16.mxu0 %v1134
  %1311 = vmatpush1.bf16.msra.mxu0 %v1133
  %1312 = vmatprep.subr.bf16.mxu0 %v1136
  %1313 = vmatpush1.bf16.msra.mxu0 %v1135
  %1314 = vmatprep.subr.bf16.mxu0 %v1138
  %1315 = vmatpush1.bf16.msra.mxu0 %v1137
  %1316 = vmatprep.subr.bf16.mxu0 %v1140
  %1317 = vmatpush1.bf16.msra.mxu0 %v1139
  %1318 = vmatprep.subr.bf16.mxu0 %v1142
  %1319 = vmatpush1.bf16.msra.mxu0 %v1141
  %1320 = vmatprep.subr.bf16.mxu0 %v1144
  %1321 = vmatpush1.bf16.msra.mxu0 %v1143
  %1322 = vmatprep.subr.bf16.mxu0 %v1146
  %1323 = vmatpush1.bf16.msra.mxu0 %v1145
  %1324 = vmatprep.subr.bf16.mxu0 %v1148
  %1325 = vmatpush1.bf16.msra.mxu0 %v1147
  %1326 = vmatprep.subr.bf16.mxu0 %v1150
  %1327 = vmatpush1.bf16.msra.mxu0 %v1149
  %1328 = vmatprep.subr.bf16.mxu0 %v1152
  %1329 = vmatpush1.bf16.msra.mxu0 %v1151
  %1330 = vmatprep.subr.bf16.mxu0 %v1154
  %1331 = vmatpush1.bf16.msra.mxu0 %v1153
  %1332 = vmatprep.subr.bf16.mxu0 %v1156
  %1333 = vmatpush1.bf16.msra.mxu0 %v1155
  %1334 = vmatprep.mubr.bf16.mxu0 %v977
  %1335 = vmatmul.mubr.bf16.gmra.mrb[0].mxu0 %v976
  %v1336 = vpop.f32.mrb[0].mxu0
  %v1337 = vadd.f32 %v1022, %v1336
  %v1338 = vpop.f32.mrb[0].mxu0
  %v1339 = vadd.f32 %v1026, %v1338
  %v1340 = vpop.f32.mrb[0].mxu0
  %v1341 = vadd.f32 %v1022, %v1340
  %v1342 = vpop.f32.mrb[0].mxu0
  %v1343 = vadd.f32 %v1026, %v1342
  %1344 = vmatprep.mubr.bf16.mxu0 %v979
  %1345 = vmatmul.mubr.bf16.gmra.mrb[0].mxu0 %v978
  %v1346 = vpop.f32.mrb[0].mxu0
  %v1347 = vadd.f32 %v1022, %v1346
  %v1348 = vpop.f32.mrb[0].mxu0
  %v1349 = vadd.f32 %v1026, %v1348
  %v1350 = vpop.f32.mrb[0].mxu0
  %v1351 = vadd.f32 %v1022, %v1350
  %v1352 = vpop.f32.mrb[0].mxu0
  %v1353 = vadd.f32 %v1026, %v1352
  %1354 = vmatprep.mubr.bf16.mxu0 %v981
  %1355 = vmatmul.mubr.bf16.gmra.mrb[0].mxu0 %v980
  %v1356 = vpop.f32.mrb[0].mxu0
  %v1357 = vadd.f32 %v1022, %v1356
  %v1358 = vpop.f32.mrb[0].mxu0
  %v1359 = vadd.f32 %v1026, %v1358
  %v1360 = vpop.f32.mrb[0].mxu0
  %v1361 = vadd.f32 %v1022, %v1360
  %v1362 = vpop.f32.mrb[0].mxu0
  %v1363 = vadd.f32 %v1026, %v1362
  %1364 = vmatprep.mubr.bf16.mxu0 %v983
  %1365 = vmatmul.mubr.bf16.gmra.mrb[0].mxu0 %v982
  %v1366 = vpop.f32.mrb[0].mxu0
  %v1367 = vadd.f32 %v1022, %v1366
  %v1368 = vpop.f32.mrb[0].mxu0
  %v1369 = vadd.f32 %v1026, %v1368
  %v1370 = vpop.f32.mrb[0].mxu0
  %v1371 = vadd.f32 %v1022, %v1370
  %v1372 = vpop.f32.mrb[0].mxu0
  %v1373 = vadd.f32 %v1026, %v1372
  %1374 = vdwg.mxu0
  %v1375 = vmul.f32 %v1337, 0.1
  %v1376 = vmul.f32 %v1339, 0.1
  %v1377 = vmul.f32 %v1341, 0.1
  %v1378 = vmul.f32 %v1343, 0.1
  %v1379 = vmul.f32 %v1347, 0.1
  %v1380 = vmul.f32 %v1349, 0.1
  %v1381 = vmul.f32 %v1351, 0.1
  %v1382 = vmul.f32 %v1353, 0.1
  %v1383 = vmul.f32 %v1357, 0.1
  %v1384 = vmul.f32 %v1359, 0.1
  %v1385 = vmul.f32 %v1361, 0.1
  %v1386 = vmul.f32 %v1363, 0.1
  %v1387 = vmul.f32 %v1367, 0.1
  %v1388 = vmul.f32 %v1369, 0.1
  %v1389 = vmul.f32 %v1371, 0.1
  %v1390 = vmul.f32 %v1373, 0.1
  %v1391 = vmax.f32 %v1337, %v1375
  %v1392 = vmax.f32 %v1339, %v1376
  %v1393 = vmax.f32 %v1341, %v1377
  %v1394 = vmax.f32 %v1343, %v1378
  %v1395 = vmax.f32 %v1347, %v1379
  %v1396 = vmax.f32 %v1349, %v1380
  %v1397 = vmax.f32 %v1351, %v1381
  %v1398 = vmax.f32 %v1353, %v1382
  %v1399 = vmax.f32 %v1357, %v1383
  %v1400 = vmax.f32 %v1359, %v1384
  %v1401 = vmax.f32 %v1361, %v1385
  %v1402 = vmax.f32 %v1363, %v1386
  %v1403 = vmax.f32 %v1367, %v1387
  %v1404 = vmax.f32 %v1369, %v1388
  %v1405 = vmax.f32 %v1371, %v1389
  %v1406 = vmax.f32 %v1373, %v1390
  %v1407 = vpack.c.bf16 %v1393, %v1391
  %v1408 = vpack.c.bf16 %v1394, %v1392
  %v1409 = vpack.c.bf16 %v1397, %v1395
  %v1410 = vpack.c.bf16 %v1398, %v1396
  %v1411 = vpack.c.bf16 %v1401, %v1399
  %v1412 = vpack.c.bf16 %v1402, %v1400
  %v1413 = vpack.c.bf16 %v1405, %v1403
  %v1414 = vpack.c.bf16 %v1406, %v1404
  %v1415 = vld [vmem:[%s4] sm:$0xff]
  %v1416 = vld [vmem:[%s4 + $0x8] sm:$0xff]
  %v1417 = vld [vmem:[%s4 + $0x10] sm:$0xff]
  %v1418 = vld [vmem:[%s4 + $0x18] sm:$0xff]
  %v1419 = vld [vmem:[%s4 + $0x20] sm:$0xff]
  %v1420 = vld [vmem:[%s4 + $0x28] sm:$0xff]
  %v1421 = vld [vmem:[%s4 + $0x30] sm:$0xff]
  %v1422 = vld [vmem:[%s4 + $0x38] sm:$0xff]
  %v1423 = vld [vmem:[%s4 + $0x40] sm:$0xff]
  %v1424 = vld [vmem:[%s4 + $0x48] sm:$0xff]
  %v1425 = vld [vmem:[%s4 + $0x50] sm:$0xff]
  %v1426 = vld [vmem:[%s4 + $0x58] sm:$0xff]
  %v1427 = vld [vmem:[%s4 + $0x60] sm:$0xff]
  %v1428 = vld [vmem:[%s4 + $0x68] sm:$0xff]
  %v1429 = vld [vmem:[%s4 + $0x70] sm:$0xff]
  %v1430 = vld [vmem:[%s4 + $0x78] sm:$0xff]
  %v1431 = vld [vmem:[%s4 + $0x80] sm:$0xff]
  %v1432 = vld [vmem:[%s4 + $0x88] sm:$0xff]
  %v1433 = vld [vmem:[%s4 + $0x90] sm:$0xff]
  %v1434 = vld [vmem:[%s4 + $0x98] sm:$0xff]
  %v1435 = vld [vmem:[%s4 + $0xa0] sm:$0xff]
  %v1436 = vld [vmem:[%s4 + $0xa8] sm:$0xff]
  %v1437 = vld [vmem:[%s4 + $0xb0] sm:$0xff]
  %v1438 = vld [vmem:[%s4 + $0xb8] sm:$0xff]
  %v1439 = vld [vmem:[%s4 + $0xc0] sm:$0xff]
  %v1440 = vld [vmem:[%s4 + $0xc8] sm:$0xff]
  %v1441 = vld [vmem:[%s4 + $0xd0] sm:$0xff]
  %v1442 = vld [vmem:[%s4 + $0xd8] sm:$0xff]
  %v1443 = vld [vmem:[%s4 + $0xe0] sm:$0xff]
  %v1444 = vld [vmem:[%s4 + $0xe8] sm:$0xff]
  %v1445 = vld [vmem:[%s4 + $0xf0] sm:$0xff]
  %v1446 = vld [vmem:[%s4 + $0xf8] sm:$0xff]
  %s1447 = scalar_lea.vmem %s6, 3
  %v1448 = vld [vmem:[%s1447] ss:$8 sm:$0x3]
  %v1450 = vlaneseq
  %v1451 = vshrl.u32 %v1450, 7
  %v1452 = vsub.s32 0, %v1451
  %v1453 = vrot.slane %v1448, %v1452
  %v1454 = vlaneseq
  %v1455 = vshrl.u32 %v1454, 7
  %v1456 = vsub.s32 1, %v1455
  %v1457 = vrot.slane %v1448, %v1456
  %v1492 = vunpack.c.l.b16 %v1415
  %v1493 = vunpack.c.h.b16 %v1415
  %v1494 = vunpack.c.l.b16 %v1416
  %v1495 = vunpack.c.h.b16 %v1416
  %v1496 = vunpack.c.l.b16 %v1417
  %v1497 = vunpack.c.h.b16 %v1417
  %v1498 = vunpack.c.l.b16 %v1418
  %v1499 = vunpack.c.h.b16 %v1418
  %v1500 = vunpack.c.l.b16 %v1419
  %v1501 = vunpack.c.h.b16 %v1419
  %v1502 = vunpack.c.l.b16 %v1420
  %v1503 = vunpack.c.h.b16 %v1420
  %v1504 = vunpack.c.l.b16 %v1421
  %v1505 = vunpack.c.h.b16 %v1421
  %v1506 = vunpack.c.l.b16 %v1422
  %v1507 = vunpack.c.h.b16 %v1422
  %v1508 = vunpack.c.l.b16 %v1423
  %v1509 = vunpack.c.h.b16 %v1423
  %v1510 = vunpack.c.l.b16 %v1424
  %v1511 = vunpack.c.h.b16 %v1424
  %v1512 = vunpack.c.l.b16 %v1425
  %v1513 = vunpack.c.h.b16 %v1425
  %v1514 = vunpack.c.l.b16 %v1426
  %v1515 = vunpack.c.h.b16 %v1426
  %v1516 = vunpack.c.l.b16 %v1427
  %v1517 = vunpack.c.h.b16 %v1427
  %v1518 = vunpack.c.l.b16 %v1428
  %v1519 = vunpack.c.h.b16 %v1428
  %v1520 = vunpack.c.l.b16 %v1429
  %v1521 = vunpack.c.h.b16 %v1429
  %v1522 = vunpack.c.l.b16 %v1430
  %v1523 = vunpack.c.h.b16 %v1430
  %v1524 = vunpack.c.l.b16 %v1431
  %v1525 = vunpack.c.h.b16 %v1431
  %v1526 = vunpack.c.l.b16 %v1432
  %v1527 = vunpack.c.h.b16 %v1432
  %v1528 = vunpack.c.l.b16 %v1433
  %v1529 = vunpack.c.h.b16 %v1433
  %v1530 = vunpack.c.l.b16 %v1434
  %v1531 = vunpack.c.h.b16 %v1434
  %v1532 = vunpack.c.l.b16 %v1435
  %v1533 = vunpack.c.h.b16 %v1435
  %v1534 = vunpack.c.l.b16 %v1436
  %v1535 = vunpack.c.h.b16 %v1436
  %v1536 = vunpack.c.l.b16 %v1437
  %v1537 = vunpack.c.h.b16 %v1437
  %v1538 = vunpack.c.l.b16 %v1438
  %v1539 = vunpack.c.h.b16 %v1438
  %v1540 = vunpack.c.l.b16 %v1439
  %v1541 = vunpack.c.h.b16 %v1439
  %v1542 = vunpack.c.l.b16 %v1440
  %v1543 = vunpack.c.h.b16 %v1440
  %v1544 = vunpack.c.l.b16 %v1441
  %v1545 = vunpack.c.h.b16 %v1441
  %v1546 = vunpack.c.l.b16 %v1442
  %v1547 = vunpack.c.h.b16 %v1442
  %v1548 = vunpack.c.l.b16 %v1443
  %v1549 = vunpack.c.h.b16 %v1443
  %v1550 = vunpack.c.l.b16 %v1444
  %v1551 = vunpack.c.h.b16 %v1444
  %v1552 = vunpack.c.l.b16 %v1445
  %v1553 = vunpack.c.h.b16 %v1445
  %v1554 = vunpack.c.l.b16 %v1446
  %v1555 = vunpack.c.h.b16 %v1446
  %v1556 = vpack.c.b16 %v1494, %v1492
  %v1557 = vpack.c.b16 %v1495, %v1493
  %v1558 = vpack.c.b16 %v1498, %v1496
  %v1559 = vpack.c.b16 %v1499, %v1497
  %v1560 = vpack.c.b16 %v1502, %v1500
  %v1561 = vpack.c.b16 %v1503, %v1501
  %v1562 = vpack.c.b16 %v1506, %v1504
  %v1563 = vpack.c.b16 %v1507, %v1505
  %v1564 = vpack.c.b16 %v1510, %v1508
  %v1565 = vpack.c.b16 %v1511, %v1509
  %v1566 = vpack.c.b16 %v1514, %v1512
  %v1567 = vpack.c.b16 %v1515, %v1513
  %v1568 = vpack.c.b16 %v1518, %v1516
  %v1569 = vpack.c.b16 %v1519, %v1517
  %v1570 = vpack.c.b16 %v1522, %v1520
  %v1571 = vpack.c.b16 %v1523, %v1521
  %v1572 = vpack.c.b16 %v1526, %v1524
  %v1573 = vpack.c.b16 %v1527, %v1525
  %v1574 = vpack.c.b16 %v1530, %v1528
  %v1575 = vpack.c.b16 %v1531, %v1529
  %v1576 = vpack.c.b16 %v1534, %v1532
  %v1577 = vpack.c.b16 %v1535, %v1533
  %v1578 = vpack.c.b16 %v1538, %v1536
  %v1579 = vpack.c.b16 %v1539, %v1537
  %v1580 = vpack.c.b16 %v1542, %v1540
  %v1581 = vpack.c.b16 %v1543, %v1541
  %v1582 = vpack.c.b16 %v1546, %v1544
  %v1583 = vpack.c.b16 %v1547, %v1545
  %v1584 = vpack.c.b16 %v1550, %v1548
  %v1585 = vpack.c.b16 %v1551, %v1549
  %v1586 = vpack.c.b16 %v1554, %v1552
  %v1587 = vpack.c.b16 %v1555, %v1553
  %1620 = vmatprep.subr.bf16.mxu0 %v1557
  %1621 = vmatpush1.bf16.msra.mxu0 %v1556
  %1622 = vmatprep.subr.bf16.mxu0 %v1559
  %1623 = vmatpush1.bf16.msra.mxu0 %v1558
  %1624 = vmatprep.subr.bf16.mxu0 %v1561
  %1625 = vmatpush1.bf16.msra.mxu0 %v1560
  %1626 = vmatprep.subr.bf16.mxu0 %v1563
  %1627 = vmatpush1.bf16.msra.mxu0 %v1562
  %1628 = vmatprep.subr.bf16.mxu0 %v1565
  %1629 = vmatpush1.bf16.msra.mxu0 %v1564
  %1630 = vmatprep.subr.bf16.mxu0 %v1567
  %1631 = vmatpush1.bf16.msra.mxu0 %v1566
  %1632 = vmatprep.subr.bf16.mxu0 %v1569
  %1633 = vmatpush1.bf16.msra.mxu0 %v1568
  %1634 = vmatprep.subr.bf16.mxu0 %v1571
  %1635 = vmatpush1.bf16.msra.mxu0 %v1570
  %1636 = vmatprep.subr.bf16.mxu0 %v1573
  %1637 = vmatpush1.bf16.msra.mxu0 %v1572
  %1638 = vmatprep.subr.bf16.mxu0 %v1575
  %1639 = vmatpush1.bf16.msra.mxu0 %v1574
  %1640 = vmatprep.subr.bf16.mxu0 %v1577
  %1641 = vmatpush1.bf16.msra.mxu0 %v1576
  %1642 = vmatprep.subr.bf16.mxu0 %v1579
  %1643 = vmatpush1.bf16.msra.mxu0 %v1578
  %1644 = vmatprep.subr.bf16.mxu0 %v1581
  %1645 = vmatpush1.bf16.msra.mxu0 %v1580
  %1646 = vmatprep.subr.bf16.mxu0 %v1583
  %1647 = vmatpush1.bf16.msra.mxu0 %v1582
  %1648 = vmatprep.subr.bf16.mxu0 %v1585
  %1649 = vmatpush1.bf16.msra.mxu0 %v1584
  %1650 = vmatprep.subr.bf16.mxu0 %v1587
  %1651 = vmatpush1.bf16.msra.mxu0 %v1586
  %1652 = vmatprep.mubr.bf16.mxu0 %v1295
  %1653 = vmatmul.mubr.bf16.gmra.mrb[0].mxu0 %v1294
  %v1654 = vpop.f32.mrb[0].mxu0
  %v1655 = vadd.f32 %v1453, %v1654
  %v1656 = vpop.f32.mrb[0].mxu0
  %v1657 = vadd.f32 %v1457, %v1656
  %v1658 = vpop.f32.mrb[0].mxu0
  %v1659 = vadd.f32 %v1453, %v1658
  %v1660 = vpop.f32.mrb[0].mxu0
  %v1661 = vadd.f32 %v1457, %v1660
  %1662 = vmatprep.mubr.bf16.mxu0 %v1297
  %1663 = vmatmul.mubr.bf16.gmra.mrb[0].mxu0 %v1296
  %v1664 = vpop.f32.mrb[0].mxu0
  %v1665 = vadd.f32 %v1453, %v1664
  %v1666 = vpop.f32.mrb[0].mxu0
  %v1667 = vadd.f32 %v1457, %v1666
  %v1668 = vpop.f32.mrb[0].mxu0
  %v1669 = vadd.f32 %v1453, %v1668
  %v1670 = vpop.f32.mrb[0].mxu0
  %v1671 = vadd.f32 %v1457, %v1670
  %1672 = vmatprep.mubr.bf16.mxu0 %v1299
  %1673 = vmatmul.mubr.bf16.gmra.mrb[0].mxu0 %v1298
  %v1674 = vpop.f32.mrb[0].mxu0
  %v1675 = vadd.f32 %v1453, %v1674
  %v1676 = vpop.f32.mrb[0].mxu0
  %v1677 = vadd.f32 %v1457, %v1676
  %v1678 = vpop.f32.mrb[0].mxu0
  %v1679 = vadd.f32 %v1453, %v1678
  %v1680 = vpop.f32.mrb[0].mxu0
  %v1681 = vadd.f32 %v1457, %v1680
  %1682 = vmatprep.mubr.bf16.mxu0 %v1301
  %1683 = vmatmul.mubr.bf16.gmra.mrb[0].mxu0 %v1300
  %v1684 = vpop.f32.mrb[0].mxu0
  %v1685 = vadd.f32 %v1453, %v1684
  %v1686 = vpop.f32.mrb[0].mxu0
  %v1687 = vadd.f32 %v1457, %v1686
  %v1688 = vpop.f32.mrb[0].mxu0
  %v1689 = vadd.f32 %v1453, %v1688
  %v1690 = vpop.f32.mrb[0].mxu0
  %v1691 = vadd.f32 %v1457, %v1690
  %1692 = vdwg.mxu0
  %v1693 = vmul.f32 %v1655, 0.1
  %v1694 = vmul.f32 %v1657, 0.1
  %v1695 = vmul.f32 %v1659, 0.1
  %v1696 = vmul.f32 %v1661, 0.1
  %v1697 = vmul.f32 %v1665, 0.1
  %v1698 = vmul.f32 %v1667, 0.1
  %v1699 = vmul.f32 %v1669, 0.1
  %v1700 = vmul.f32 %v1671, 0.1
  %v1701 = vmul.f32 %v1675, 0.1
  %v1702 = vmul.f32 %v1677, 0.1
  %v1703 = vmul.f32 %v1679, 0.1
  %v1704 = vmul.f32 %v1681, 0.1
  %v1705 = vmul.f32 %v1685, 0.1
  %v1706 = vmul.f32 %v1687, 0.1
  %v1707 = vmul.f32 %v1689, 0.1
  %v1708 = vmul.f32 %v1691, 0.1
  %v1709 = vmax.f32 %v1655, %v1693
  %v1710 = vmax.f32 %v1657, %v1694
  %v1711 = vmax.f32 %v1659, %v1695
  %v1712 = vmax.f32 %v1661, %v1696
  %v1713 = vmax.f32 %v1665, %v1697
  %v1714 = vmax.f32 %v1667, %v1698
  %v1715 = vmax.f32 %v1669, %v1699
  %v1716 = vmax.f32 %v1671, %v1700
  %v1717 = vmax.f32 %v1675, %v1701
  %v1718 = vmax.f32 %v1677, %v1702
  %v1719 = vmax.f32 %v1679, %v1703
  %v1720 = vmax.f32 %v1681, %v1704
  %v1721 = vmax.f32 %v1685, %v1705
  %v1722 = vmax.f32 %v1687, %v1706
  %v1723 = vmax.f32 %v1689, %v1707
  %v1724 = vmax.f32 %v1691, %v1708
  %v1725 = vpack.c.bf16 %v1711, %v1709
  %v1726 = vpack.c.bf16 %v1712, %v1710
  %v1727 = vpack.c.bf16 %v1715, %v1713
  %v1728 = vpack.c.bf16 %v1716, %v1714
  %v1729 = vpack.c.bf16 %v1719, %v1717
  %v1730 = vpack.c.bf16 %v1720, %v1718
  %v1731 = vpack.c.bf16 %v1723, %v1721
  %v1732 = vpack.c.bf16 %v1724, %v1722
  %1733 = vmatprep.subr.bf16.mxu0 %v1557
  %1734 = vmatpush1.bf16.msra.mxu0 %v1556
  %1735 = vmatprep.subr.bf16.mxu0 %v1559
  %1736 = vmatpush1.bf16.msra.mxu0 %v1558
  %1737 = vmatprep.subr.bf16.mxu0 %v1561
  %1738 = vmatpush1.bf16.msra.mxu0 %v1560
  %1739 = vmatprep.subr.bf16.mxu0 %v1563
  %1740 = vmatpush1.bf16.msra.mxu0 %v1562
  %1741 = vmatprep.subr.bf16.mxu0 %v1565
  %1742 = vmatpush1.bf16.msra.mxu0 %v1564
  %1743 = vmatprep.subr.bf16.mxu0 %v1567
  %1744 = vmatpush1.bf16.msra.mxu0 %v1566
  %1745 = vmatprep.subr.bf16.mxu0 %v1569
  %1746 = vmatpush1.bf16.msra.mxu0 %v1568
  %1747 = vmatprep.subr.bf16.mxu0 %v1571
  %1748 = vmatpush1.bf16.msra.mxu0 %v1570
  %1749 = vmatprep.subr.bf16.mxu0 %v1573
  %1750 = vmatpush1.bf16.msra.mxu0 %v1572
  %1751 = vmatprep.subr.bf16.mxu0 %v1575
  %1752 = vmatpush1.bf16.msra.mxu0 %v1574
  %1753 = vmatprep.subr.bf16.mxu0 %v1577
  %1754 = vmatpush1.bf16.msra.mxu0 %v1576
  %1755 = vmatprep.subr.bf16.mxu0 %v1579
  %1756 = vmatpush1.bf16.msra.mxu0 %v1578
  %1757 = vmatprep.subr.bf16.mxu0 %v1581
  %1758 = vmatpush1.bf16.msra.mxu0 %v1580
  %1759 = vmatprep.subr.bf16.mxu0 %v1583
  %1760 = vmatpush1.bf16.msra.mxu0 %v1582
  %1761 = vmatprep.subr.bf16.mxu0 %v1585
  %1762 = vmatpush1.bf16.msra.mxu0 %v1584
  %1763 = vmatprep.subr.bf16.mxu0 %v1587
  %1764 = vmatpush1.bf16.msra.mxu0 %v1586
  %1765 = vmatprep.mubr.bf16.mxu0 %v1408
  %1766 = vmatmul.mubr.bf16.gmra.mrb[0].mxu0 %v1407
  %v1767 = vpop.f32.mrb[0].mxu0
  %v1768 = vadd.f32 %v1453, %v1767
  %v1769 = vpop.f32.mrb[0].mxu0
  %v1770 = vadd.f32 %v1457, %v1769
  %v1771 = vpop.f32.mrb[0].mxu0
  %v1772 = vadd.f32 %v1453, %v1771
  %v1773 = vpop.f32.mrb[0].mxu0
  %v1774 = vadd.f32 %v1457, %v1773
  %1775 = vmatprep.mubr.bf16.mxu0 %v1410
  %1776 = vmatmul.mubr.bf16.gmra.mrb[0].mxu0 %v1409
  %v1777 = vpop.f32.mrb[0].mxu0
  %v1778 = vadd.f32 %v1453, %v1777
  %v1779 = vpop.f32.mrb[0].mxu0
  %v1780 = vadd.f32 %v1457, %v1779
  %v1781 = vpop.f32.mrb[0].mxu0
  %v1782 = vadd.f32 %v1453, %v1781
  %v1783 = vpop.f32.mrb[0].mxu0
  %v1784 = vadd.f32 %v1457, %v1783
  %1785 = vmatprep.mubr.bf16.mxu0 %v1412
  %1786 = vmatmul.mubr.bf16.gmra.mrb[0].mxu0 %v1411
  %v1787 = vpop.f32.mrb[0].mxu0
  %v1788 = vadd.f32 %v1453, %v1787
  %v1789 = vpop.f32.mrb[0].mxu0
  %v1790 = vadd.f32 %v1457, %v1789
  %v1791 = vpop.f32.mrb[0].mxu0
  %v1792 = vadd.f32 %v1453, %v1791
  %v1793 = vpop.f32.mrb[0].mxu0
  %v1794 = vadd.f32 %v1457, %v1793
  %1795 = vmatprep.mubr.bf16.mxu0 %v1414
  %1796 = vmatmul.mubr.bf16.gmra.mrb[0].mxu0 %v1413
  %v1797 = vpop.f32.mrb[0].mxu0
  %v1798 = vadd.f32 %v1453, %v1797
  %v1799 = vpop.f32.mrb[0].mxu0
  %v1800 = vadd.f32 %v1457, %v1799
  %v1801 = vpop.f32.mrb[0].mxu0
  %v1802 = vadd.f32 %v1453, %v1801
  %v1803 = vpop.f32.mrb[0].mxu0
  %v1804 = vadd.f32 %v1457, %v1803
  %1805 = vdwg.mxu0
  %v1806 = vmul.f32 %v1768, 0.1
  %v1807 = vmul.f32 %v1770, 0.1
  %v1808 = vmul.f32 %v1772, 0.1
  %v1809 = vmul.f32 %v1774, 0.1
  %v1810 = vmul.f32 %v1778, 0.1
  %v1811 = vmul.f32 %v1780, 0.1
  %v1812 = vmul.f32 %v1782, 0.1
  %v1813 = vmul.f32 %v1784, 0.1
  %v1814 = vmul.f32 %v1788, 0.1
  %v1815 = vmul.f32 %v1790, 0.1
  %v1816 = vmul.f32 %v1792, 0.1
  %v1817 = vmul.f32 %v1794, 0.1
  %v1818 = vmul.f32 %v1798, 0.1
  %v1819 = vmul.f32 %v1800, 0.1
  %v1820 = vmul.f32 %v1802, 0.1
  %v1821 = vmul.f32 %v1804, 0.1
  %v1822 = vmax.f32 %v1768, %v1806
  %v1823 = vmax.f32 %v1770, %v1807
  %v1824 = vmax.f32 %v1772, %v1808
  %v1825 = vmax.f32 %v1774, %v1809
  %v1826 = vmax.f32 %v1778, %v1810
  %v1827 = vmax.f32 %v1780, %v1811
  %v1828 = vmax.f32 %v1782, %v1812
  %v1829 = vmax.f32 %v1784, %v1813
  %v1830 = vmax.f32 %v1788, %v1814
  %v1831 = vmax.f32 %v1790, %v1815
  %v1832 = vmax.f32 %v1792, %v1816
  %v1833 = vmax.f32 %v1794, %v1817
  %v1834 = vmax.f32 %v1798, %v1818
  %v1835 = vmax.f32 %v1800, %v1819
  %v1836 = vmax.f32 %v1802, %v1820
  %v1837 = vmax.f32 %v1804, %v1821
  %v1838 = vpack.c.bf16 %v1824, %v1822
  %v1839 = vpack.c.bf16 %v1825, %v1823
  %v1840 = vpack.c.bf16 %v1828, %v1826
  %v1841 = vpack.c.bf16 %v1829, %v1827
  %v1842 = vpack.c.bf16 %v1832, %v1830
  %v1843 = vpack.c.bf16 %v1833, %v1831
  %v1844 = vpack.c.bf16 %v1836, %v1834
  %v1845 = vpack.c.bf16 %v1837, %v1835
  %v1846 = vld [vmem:[%s5] sm:$0xf]
  %v1847 = vld [vmem:[%s5 + $0x4] sm:$0xf]
  %v1848 = vld [vmem:[%s5 + $0x8] sm:$0xf]
  %v1849 = vld [vmem:[%s5 + $0xc] sm:$0xf]
  %v1850 = vld [vmem:[%s5 + $0x10] sm:$0xf]
  %v1851 = vld [vmem:[%s5 + $0x14] sm:$0xf]
  %v1852 = vld [vmem:[%s5 + $0x18] sm:$0xf]
  %v1853 = vld [vmem:[%s5 + $0x1c] sm:$0xf]
  %v1854 = vld [vmem:[%s5 + $0x20] sm:$0xf]
  %v1855 = vld [vmem:[%s5 + $0x24] sm:$0xf]
  %v1856 = vld [vmem:[%s5 + $0x28] sm:$0xf]
  %v1857 = vld [vmem:[%s5 + $0x2c] sm:$0xf]
  %v1858 = vld [vmem:[%s5 + $0x30] sm:$0xf]
  %v1859 = vld [vmem:[%s5 + $0x34] sm:$0xf]
  %v1860 = vld [vmem:[%s5 + $0x38] sm:$0xf]
  %v1861 = vld [vmem:[%s5 + $0x3c] sm:$0xf]
  %v1862 = vld [vmem:[%s5 + $0x40] sm:$0xf]
  %v1863 = vld [vmem:[%s5 + $0x44] sm:$0xf]
  %v1864 = vld [vmem:[%s5 + $0x48] sm:$0xf]
  %v1865 = vld [vmem:[%s5 + $0x4c] sm:$0xf]
  %v1866 = vld [vmem:[%s5 + $0x50] sm:$0xf]
  %v1867 = vld [vmem:[%s5 + $0x54] sm:$0xf]
  %v1868 = vld [vmem:[%s5 + $0x58] sm:$0xf]
  %v1869 = vld [vmem:[%s5 + $0x5c] sm:$0xf]
  %v1870 = vld [vmem:[%s5 + $0x60] sm:$0xf]
  %v1871 = vld [vmem:[%s5 + $0x64] sm:$0xf]
  %v1872 = vld [vmem:[%s5 + $0x68] sm:$0xf]
  %v1873 = vld [vmem:[%s5 + $0x6c] sm:$0xf]
  %v1874 = vld [vmem:[%s5 + $0x70] sm:$0xf]
  %v1875 = vld [vmem:[%s5 + $0x74] sm:$0xf]
  %v1876 = vld [vmem:[%s5 + $0x78] sm:$0xf]
  %v1877 = vld [vmem:[%s5 + $0x7c] sm:$0xf]
  %v1878 = vld [vmem:[%s6 + $0x4] ss:$0 sm:$0xff]
  %v1911 = vunpack.c.l.b16 %v1846
  %v1912 = vunpack.c.l.b16 %v1847
  %v1913 = vunpack.c.l.b16 %v1848
  %v1914 = vunpack.c.l.b16 %v1849
  %v1915 = vunpack.c.l.b16 %v1850
  %v1916 = vunpack.c.l.b16 %v1851
  %v1917 = vunpack.c.l.b16 %v1852
  %v1918 = vunpack.c.l.b16 %v1853
  %v1919 = vunpack.c.l.b16 %v1854
  %v1920 = vunpack.c.l.b16 %v1855
  %v1921 = vunpack.c.l.b16 %v1856
  %v1922 = vunpack.c.l.b16 %v1857
  %v1923 = vunpack.c.l.b16 %v1858
  %v1924 = vunpack.c.l.b16 %v1859
  %v1925 = vunpack.c.l.b16 %v1860
  %v1926 = vunpack.c.l.b16 %v1861
  %v1927 = vunpack.c.l.b16 %v1862
  %v1928 = vunpack.c.l.b16 %v1863
  %v1929 = vunpack.c.l.b16 %v1864
  %v1930 = vunpack.c.l.b16 %v1865
  %v1931 = vunpack.c.l.b16 %v1866
  %v1932 = vunpack.c.l.b16 %v1867
  %v1933 = vunpack.c.l.b16 %v1868
  %v1934 = vunpack.c.l.b16 %v1869
  %v1935 = vunpack.c.l.b16 %v1870
  %v1936 = vunpack.c.l.b16 %v1871
  %v1937 = vunpack.c.l.b16 %v1872
  %v1938 = vunpack.c.l.b16 %v1873
  %v1939 = vunpack.c.l.b16 %v1874
  %v1940 = vunpack.c.l.b16 %v1875
  %v1941 = vunpack.c.l.b16 %v1876
  %v1942 = vunpack.c.l.b16 %v1877
  %v1943 = vpack.c.b16 %v1912, %v1911
  %v1944 = vpack.c.b16 %v1914, %v1913
  %v1945 = vpack.c.b16 %v1916, %v1915
  %v1946 = vpack.c.b16 %v1918, %v1917
  %v1947 = vpack.c.b16 %v1920, %v1919
  %v1948 = vpack.c.b16 %v1922, %v1921
  %v1949 = vpack.c.b16 %v1924, %v1923
  %v1950 = vpack.c.b16 %v1926, %v1925
  %v1951 = vpack.c.b16 %v1928, %v1927
  %v1952 = vpack.c.b16 %v1930, %v1929
  %v1953 = vpack.c.b16 %v1932, %v1931
  %v1954 = vpack.c.b16 %v1934, %v1933
  %v1955 = vpack.c.b16 %v1936, %v1935
  %v1956 = vpack.c.b16 %v1938, %v1937
  %v1957 = vpack.c.b16 %v1940, %v1939
  %v1958 = vpack.c.b16 %v1942, %v1941
  %1975 = vmatprep.subr.bf16.mxu0 0
  %1976 = vmatpush1.bf16.msra.mxu0 %v1943
  %1977 = vmatprep.subr.bf16.mxu0 0
  %1978 = vmatpush1.bf16.msra.mxu0 %v1944
  %1979 = vmatprep.subr.bf16.mxu0 0
  %1980 = vmatpush1.bf16.msra.mxu0 %v1945
  %1981 = vmatprep.subr.bf16.mxu0 0
  %1982 = vmatpush1.bf16.msra.mxu0 %v1946
  %1983 = vmatprep.subr.bf16.mxu0 0
  %1984 = vmatpush1.bf16.msra.mxu0 %v1947
  %1985 = vmatprep.subr.bf16.mxu0 0
  %1986 = vmatpush1.bf16.msra.mxu0 %v1948
  %1987 = vmatprep.subr.bf16.mxu0 0
  %1988 = vmatpush1.bf16.msra.mxu0 %v1949
  %1989 = vmatprep.subr.bf16.mxu0 0
  %1990 = vmatpush1.bf16.msra.mxu0 %v1950
  %1991 = vmatprep.subr.bf16.mxu0 0
  %1992 = vmatpush1.bf16.msra.mxu0 %v1951
  %1993 = vmatprep.subr.bf16.mxu0 0
  %1994 = vmatpush1.bf16.msra.mxu0 %v1952
  %1995 = vmatprep.subr.bf16.mxu0 0
  %1996 = vmatpush1.bf16.msra.mxu0 %v1953
  %1997 = vmatprep.subr.bf16.mxu0 0
  %1998 = vmatpush1.bf16.msra.mxu0 %v1954
  %1999 = vmatprep.subr.bf16.mxu0 0
  %2000 = vmatpush1.bf16.msra.mxu0 %v1955
  %2001 = vmatprep.subr.bf16.mxu0 0
  %2002 = vmatpush1.bf16.msra.mxu0 %v1956
  %2003 = vmatprep.subr.bf16.mxu0 0
  %2004 = vmatpush1.bf16.msra.mxu0 %v1957
  %2005 = vmatprep.subr.bf16.mxu0 0
  %2006 = vmatpush1.bf16.msra.mxu0 %v1958
  %2007 = vmatprep.mubr.bf16.mxu0 %v1726
  %2008 = vmatmul.mubr.bf16.gmra.mrb[0].mxu0 %v1725
  %v2009 = vpop.f32.mrb[0].mxu0
  %v2010 = vadd.f32 %v1878, %v2009
  %v2011 = vpop.f32.mrb[0].mxu0
  %v2012 = vpop.f32.mrb[0].mxu0
  %v2013 = vadd.f32 %v1878, %v2012
  %v2014 = vpop.f32.mrb[0].mxu0
  %2015 = vmatprep.mubr.bf16.mxu0 %v1728
  %2016 = vmatmul.mubr.bf16.gmra.mrb[0].mxu0 %v1727
  %v2017 = vpop.f32.mrb[0].mxu0
  %v2018 = vadd.f32 %v1878, %v2017
  %v2019 = vpop.f32.mrb[0].mxu0
  %v2020 = vpop.f32.mrb[0].mxu0
  %v2021 = vadd.f32 %v1878, %v2020
  %v2022 = vpop.f32.mrb[0].mxu0
  %2023 = vmatprep.mubr.bf16.mxu0 %v1730
  %2024 = vmatmul.mubr.bf16.gmra.mrb[0].mxu0 %v1729
  %v2025 = vpop.f32.mrb[0].mxu0
  %v2026 = vadd.f32 %v1878, %v2025
  %v2027 = vpop.f32.mrb[0].mxu0
  %v2028 = vpop.f32.mrb[0].mxu0
  %v2029 = vadd.f32 %v1878, %v2028
  %v2030 = vpop.f32.mrb[0].mxu0
  %2031 = vmatprep.mubr.bf16.mxu0 %v1732
  %2032 = vmatmul.mubr.bf16.gmra.mrb[0].mxu0 %v1731
  %v2033 = vpop.f32.mrb[0].mxu0
  %v2034 = vadd.f32 %v1878, %v2033
  %v2035 = vpop.f32.mrb[0].mxu0
  %v2036 = vpop.f32.mrb[0].mxu0
  %v2037 = vadd.f32 %v1878, %v2036
  %v2038 = vpop.f32.mrb[0].mxu0
  %2039 = vdwg.mxu0
  %2040 = vmatprep.subr.bf16.mxu0 0
  %2041 = vmatpush1.bf16.msra.mxu0 %v1943
  %2042 = vmatprep.subr.bf16.mxu0 0
  %2043 = vmatpush1.bf16.msra.mxu0 %v1944
  %2044 = vmatprep.subr.bf16.mxu0 0
  %2045 = vmatpush1.bf16.msra.mxu0 %v1945
  %2046 = vmatprep.subr.bf16.mxu0 0
  %2047 = vmatpush1.bf16.msra.mxu0 %v1946
  %2048 = vmatprep.subr.bf16.mxu0 0
  %2049 = vmatpush1.bf16.msra.mxu0 %v1947
  %2050 = vmatprep.subr.bf16.mxu0 0
  %2051 = vmatpush1.bf16.msra.mxu0 %v1948
  %2052 = vmatprep.subr.bf16.mxu0 0
  %2053 = vmatpush1.bf16.msra.mxu0 %v1949
  %2054 = vmatprep.subr.bf16.mxu0 0
  %2055 = vmatpush1.bf16.msra.mxu0 %v1950
  %2056 = vmatprep.subr.bf16.mxu0 0
  %2057 = vmatpush1.bf16.msra.mxu0 %v1951
  %2058 = vmatprep.subr.bf16.mxu0 0
  %2059 = vmatpush1.bf16.msra.mxu0 %v1952
  %2060 = vmatprep.subr.bf16.mxu0 0
  %2061 = vmatpush1.bf16.msra.mxu0 %v1953
  %2062 = vmatprep.subr.bf16.mxu0 0
  %2063 = vmatpush1.bf16.msra.mxu0 %v1954
  %2064 = vmatprep.subr.bf16.mxu0 0
  %2065 = vmatpush1.bf16.msra.mxu0 %v1955
  %2066 = vmatprep.subr.bf16.mxu0 0
  %2067 = vmatpush1.bf16.msra.mxu0 %v1956
  %2068 = vmatprep.subr.bf16.mxu0 0
  %2069 = vmatpush1.bf16.msra.mxu0 %v1957
  %2070 = vmatprep.subr.bf16.mxu0 0
  %2071 = vmatpush1.bf16.msra.mxu0 %v1958
  %2072 = vmatprep.mubr.bf16.mxu0 %v1839
  %2073 = vmatmul.mubr.bf16.gmra.mrb[0].mxu0 %v1838
  %v2074 = vpop.f32.mrb[0].mxu0
  %v2075 = vadd.f32 %v1878, %v2074
  %v2076 = vpop.f32.mrb[0].mxu0
  %v2077 = vpop.f32.mrb[0].mxu0
  %v2078 = vadd.f32 %v1878, %v2077
  %v2079 = vpop.f32.mrb[0].mxu0
  %2080 = vmatprep.mubr.bf16.mxu0 %v1841
  %2081 = vmatmul.mubr.bf16.gmra.mrb[0].mxu0 %v1840
  %v2082 = vpop.f32.mrb[0].mxu0
  %v2083 = vadd.f32 %v1878, %v2082
  %v2084 = vpop.f32.mrb[0].mxu0
  %v2085 = vpop.f32.mrb[0].mxu0
  %v2086 = vadd.f32 %v1878, %v2085
  %v2087 = vpop.f32.mrb[0].mxu0
  %2088 = vmatprep.mubr.bf16.mxu0 %v1843
  %2089 = vmatmul.mubr.bf16.gmra.mrb[0].mxu0 %v1842
  %v2090 = vpop.f32.mrb[0].mxu0
  %v2091 = vadd.f32 %v1878, %v2090
  %v2092 = vpop.f32.mrb[0].mxu0
  %v2093 = vpop.f32.mrb[0].mxu0
  %v2094 = vadd.f32 %v1878, %v2093
  %v2095 = vpop.f32.mrb[0].mxu0
  %2096 = vmatprep.mubr.bf16.mxu0 %v1845
  %2097 = vmatmul.mubr.bf16.gmra.mrb[0].mxu0 %v1844
  %v2098 = vpop.f32.mrb[0].mxu0
  %v2099 = vadd.f32 %v1878, %v2098
  %v2100 = vpop.f32.mrb[0].mxu0
  %v2101 = vpop.f32.mrb[0].mxu0
  %v2102 = vadd.f32 %v1878, %v2101
  %v2103 = vpop.f32.mrb[0].mxu0
  %2104 = vdwg.mxu0
  %2105 = vst [vmem:[%s7] sm:$0xff] %v2010
  %2106 = vst [vmem:[%s7 + $0x8] sm:$0xff] %v2013
  %2107 = vst [vmem:[%s7 + $0x10] sm:$0xff] %v2018
  %2108 = vst [vmem:[%s7 + $0x18] sm:$0xff] %v2021
  %2109 = vst [vmem:[%s7 + $0x20] sm:$0xff] %v2026
  %2110 = vst [vmem:[%s7 + $0x28] sm:$0xff] %v2029
  %2111 = vst [vmem:[%s7 + $0x30] sm:$0xff] %v2034
  %2112 = vst [vmem:[%s7 + $0x38] sm:$0xff] %v2037
  %2113 = vst [vmem:[%s7 + $0x40] sm:$0xff] %v2075
  %2114 = vst [vmem:[%s7 + $0x48] sm:$0xff] %v2078
  %2115 = vst [vmem:[%s7 + $0x50] sm:$0xff] %v2083
  %2116 = vst [vmem:[%s7 + $0x58] sm:$0xff] %v2086
  %2117 = vst [vmem:[%s7 + $0x60] sm:$0xff] %v2091
  %2118 = vst [vmem:[%s7 + $0x68] sm:$0xff] %v2094
  %2119 = vst [vmem:[%s7 + $0x70] sm:$0xff] %v2099
  %2120 = vst [vmem:[%s7 + $0x78] sm:$0xff] %v2102
  // Predicated region
  $region30: #{autoregressive_forward.1} parent=0 // pred_check
    _
  $region31: #{autoregressive_forward.1} parent=0 // pred_check_branch
    %2122 = sbr.rel (0) target = $region33
  $region32: #{autoregressive_forward.1} parent=0 // pred_region
    _
  $region33: #{autoregressive_forward.1} parent=0 // pred_fallthru
    _
  // Predicated region
  $region34: #{autoregressive_forward.1} parent=0 // pred_check
    _
  $region35: #{autoregressive_forward.1} parent=0 // pred_check_branch
    %2124 = sbr.rel (0) target = $region37
  $region36: #{autoregressive_forward.1} parent=0 // pred_region
    _
  $region37: #{autoregressive_forward.1} parent=0 // pred_fallthru
    _

</llo_original>
